<compile_context>
chip_gen: v5e
topology: v5e:2x2
jax: 0.10.0
libtpu: 0.0.40
codegen_flags: <defaults>
</compile_context>

<pallas_src>
from functools import partial

import jax
import jax.numpy as jnp
from jax import lax
from jax.experimental import pallas as pl
from jax.experimental.pallas import tpu as pltpu

LN_EPS = 1e-5


def _round_up(n, m):
    return ((n + m - 1) // m) * m


def _vmem_capacity_bytes():
    try:
        return int(pltpu.get_tpu_info().vmem_capacity_bytes)
    except Exception:
        return 64 * 1024 * 1024  # conservative (v7x-sized) default


def _conv_im2col(x_val, w_ref, k):
    """y[i] = sum_dk x_val[i + dk] @ w[dk*Cin:(dk+1)*Cin, :].

    The k taps are folded into the MXU contraction dim: the shifted copies of
    x_val (pltpu.roll, XLU slot) are concatenated along lanes and contracted
    in a single matmul against the tap-major [k*Cin, Cout] weight.  Rows of
    the result beyond the valid window involve wrapped rows and must be
    sliced away by the caller.  Returns (f32 result, list of shifted copies)
    so one shifted copy can be reused as the residual.
    """
    if k == 1:
        return jnp.dot(x_val, w_ref[...], preferred_element_type=jnp.float32), [x_val]
    rows = x_val.shape[0]
    shifted = [x_val] + [pltpu.roll(x_val, rows - dk, axis=0) for dk in range(1, k)]
    lhs = jnp.concatenate(shifted, axis=-1)                     # [rows, k*Cin]
    return jnp.dot(lhs, w_ref[...], preferred_element_type=jnp.float32), shifted


def _ffn_kernel(x_hbm, w1_ref, b1_ref, w2_ref, b2_ref, g_ref, bt_ref, o_ref,
                xbuf, sem, *, d_valid, k1, k2, halo, tile_t, seq_len, cdt):
    b = pl.program_id(0)
    t = pl.program_id(1)
    rows = xbuf.shape[0]                      # TILE_T + 2*halo rounded up to 8
    p2 = (k2 - 1) // 2

    # ---- fetch this step's halo'd x window straight from HBM (no halo dup) --
    row0 = pl.multiple_of(t * tile_t, 8)
    cp = pltpu.make_async_copy(x_hbm.at[b, pl.ds(row0, rows), :], xbuf, sem)
    cp.start()
    cp.wait()

    xp = xbuf[...]                            # [rows, C_pad], original dtype
    xc = xp if xp.dtype == cdt else xp.astype(cdt)

    # ---- conv1 (+bias, ReLU): taps folded into the MXU contraction dim ------
    acc1, shifts = _conv_im2col(xc, w1_ref, k1)                 # f32 [rows, H_pad]
    h = jnp.maximum(acc1 + b1_ref[...], 0.0)
    if k2 > 1:
        # conv2 consumes the zero-PADDED h (PyTorch pads h, not conv1 of the
        # padded x): zero h rows whose global position falls outside [0, T).
        pos = lax.broadcasted_iota(jnp.int32, (rows, 1), 0) + (t * tile_t - p2)
        h = jnp.where((pos >= 0) & (pos < seq_len), h, 0.0)
    h = h.astype(cdt)                                           # one cast for 2nd MXU pass

    # ---- conv2 (+bias) -------------------------------------------------------
    acc2, _ = _conv_im2col(h, w2_ref, k2)                       # f32 [rows, C_pad]
    y = acc2[:tile_t] + b2_ref[...]

    # ---- residual: reuse the halo-shift rolled copy built for conv1 ---------
    if halo == 0:
        res = xp[:tile_t]
    elif halo < k1 and xp.dtype == cdt:
        res = shifts[halo][:tile_t]
    else:
        res = pltpu.roll(xp, rows - halo, axis=0)[:tile_t]
    z = y + res.astype(jnp.float32)                             # f32 [tile_t, C_pad]

    # ---- LayerNorm over the true channel count (padded lanes masked) --------
    c_pad = z.shape[-1]
    inv_c = 1.0 / d_valid
    if c_pad != d_valid:
        valid = lax.broadcasted_iota(jnp.int32, z.shape, 1) < d_valid
        zm = jnp.where(valid, z, 0.0)
    else:
        zm = z
    mean = jnp.sum(zm, axis=-1, keepdims=True) * inv_c
    zc = z - mean
    zcm = jnp.where(valid, zc, 0.0) if c_pad != d_valid else zc
    var = jnp.sum(zcm * zcm, axis=-1, keepdims=True) * inv_c
    out = zc * lax.rsqrt(var + LN_EPS) * g_ref[...] + bt_ref[...]
    o_ref[0] = out[:, :d_valid].astype(o_ref.dtype)


def positionwise_ffn(x, w1, b1, w2, b2, gamma, beta, *, tile_t=None,
                     compute_dtype=None):
    """x: [B, T, d_in]; w1: [d_hid, d_in, k1] (PyTorch Conv1d layout);
    w2: [d_in, d_hid, k2]; b1: [d_hid]; b2: [d_in]; gamma, beta: [d_in]."""
    B, T, C = x.shape
    d_hid, c_in, k1 = w1.shape
    c_out, d_hid2, k2 = w2.shape
    assert c_in == C and c_out == C and d_hid2 == d_hid
    assert k1 % 2 == 1 and k2 % 2 == 1, "odd kernel sizes keep sequence length"
    p1, p2 = (k1 - 1) // 2, (k2 - 1) // 2
    halo = p1 + p2

    cdt = jnp.dtype(compute_dtype) if compute_dtype is not None else x.dtype

    # lane-align channel dims (zero padding; LN is masked to the true d_in)
    C_pad = _round_up(C, 128)
    H_pad = _round_up(d_hid, 128)

    # generation-aware T tiling / VMEM budget (v5e/v6e: 128 MiB, v7x: 64 MiB)
    vmem_cap = _vmem_capacity_bytes()
    if tile_t is None:
        tile_t = 512 if vmem_cap >= 96 * 1024 * 1024 else 256
    vmem_limit = min(96 * 1024 * 1024, max(32 * 1024 * 1024, vmem_cap * 3 // 4))

    TILE_T = tile_t if T >= tile_t else max(8, _round_up(T, 8))
    n_t = -(-T // TILE_T)
    R = _round_up(TILE_T + 2 * halo, 8)        # rows DMA'd per grid step
    L = (n_t - 1) * TILE_T + R                 # padded sequence length needed

    # single padded copy of x in HBM (conv zero-pad + lane alignment); the
    # per-tile halo'd windows are DMA'd from it inside the kernel, so no
    # duplicated / halo-expanded copy of the input is ever materialized.
    x_pad = jnp.pad(x, ((0, 0), (halo, L - halo - T), (0, C_pad - C)))

    # weights pre-transposed to tap-major 2D [k*C_in_pad, C_out_pad] so the
    # conv taps live in the matmul contraction dim; padded / converted once.
    w1_2d = jnp.pad(jnp.transpose(w1, (2, 1, 0)),
                    ((0, 0), (0, C_pad - C), (0, H_pad - d_hid))
                    ).astype(cdt).reshape(k1 * C_pad, H_pad)
    w2_2d = jnp.pad(jnp.transpose(w2, (2, 1, 0)),
                    ((0, 0), (0, H_pad - d_hid), (0, C_pad - C))
                    ).astype(cdt).reshape(k2 * H_pad, C_pad)
    # epilogue params stored once in f32, shaped [1, lanes]
    b1_r = jnp.pad(b1, (0, H_pad - d_hid)).astype(jnp.float32).reshape(1, H_pad)
    b2_r = jnp.pad(b2, (0, C_pad - C)).astype(jnp.float32).reshape(1, C_pad)
    g_r = jnp.pad(gamma, (0, C_pad - C)).astype(jnp.float32).reshape(1, C_pad)
    bt_r = jnp.pad(beta, (0, C_pad - C)).astype(jnp.float32).reshape(1, C_pad)

    kernel = partial(_ffn_kernel, d_valid=C, k1=k1, k2=k2, halo=halo,
                     tile_t=TILE_T, seq_len=T, cdt=cdt)

    bytes_params = ((w1_2d.size + w2_2d.size) * cdt.itemsize
                    + (b1_r.size + b2_r.size + g_r.size + bt_r.size) * 4)
    cost = pl.CostEstimate(
        flops=int(2 * B * T * (k1 * C * d_hid + k2 * d_hid * C)),
        transcendentals=int(B * T),
        bytes_accessed=int(x.size * x.dtype.itemsize
                           + B * T * C * x.dtype.itemsize + bytes_params))

    def _call(single_buffer_consts):
        kw = {"pipeline_mode": pl.Buffered(1)} if single_buffer_consts else {}
        const = lambda a: pl.BlockSpec(a.shape, lambda b_, t_: (0, 0), **kw)
        return pl.pallas_call(
            kernel,
            out_shape=jax.ShapeDtypeStruct((B, T, C), x.dtype),
            grid_spec=pltpu.PrefetchScalarGridSpec(
                num_scalar_prefetch=0,
                grid=(B, n_t),
                in_specs=[
                    pl.BlockSpec(memory_space=pl.ANY),   # x stays in HBM
                    const(w1_2d), const(b1_r),
                    const(w2_2d), const(b2_r),
                    const(g_r), const(bt_r),
                ],
                out_specs=pl.BlockSpec((1, TILE_T, C), lambda b_, t_: (b_, t_, 0)),
                scratch_shapes=[pltpu.VMEM((R, C_pad), x.dtype),
                                pltpu.SemaphoreType.DMA(())],
            ),
            compiler_params=pltpu.CompilerParams(
                dimension_semantics=("parallel", "parallel"),
                vmem_limit_bytes=vmem_limit),
            cost_estimate=cost,
        )(x_pad, w1_2d, b1_r, w2_2d, b2_r, g_r, bt_r)

    try:
        # Constants never change across the grid: request single buffering to
        # free VMEM (matters most against v7x's 64 MiB).  Fall back cleanly if
        # this jax build rejects pipeline_mode=pl.Buffered(1).
        return _call(True)
    except Exception:
        return _call(False)


def _reference(x, w1, b1, w2, b2, gamma, beta):
    """Pure-JAX reference mirroring the PyTorch forward (eval mode)."""
    k1, k2 = w1.shape[2], w2.shape[2]
    p1, p2 = (k1 - 1) // 2, (k2 - 1) // 2
    xt = jnp.transpose(x, (0, 2, 1))  # [B, C, T]
    h = lax.conv_general_dilated(xt, w1, (1,), [(p1, p1)],
                                 dimension_numbers=("NCH", "OIH", "NCH"))
    h = jnp.maximum(h + b1[None, :, None], 0.0)
    y = lax.conv_general_dilated(h, w2, (1,), [(p2, p2)],
                                 dimension_numbers=("NCH", "OIH", "NCH"))
    y = y + b2[None, :, None]
    y = jnp.transpose(y, (0, 2, 1))
    z = y + x
    mean = z.mean(-1, keepdims=True)
    var = ((z - mean) ** 2).mean(-1, keepdims=True)
    return (z - mean) / jnp.sqrt(var + LN_EPS) * gamma + beta


if __name__ == "__main__":
    B, T, d_in, d_hid = 2, 16, 8, 32
    kernel_size = (9, 1)

    key = jax.random.PRNGKey(0)
    kx, kw1, kb1, kw2, kb2 = jax.random.split(key, 5)

    x = jax.random.normal(kx, (B, T, d_in), dtype=jnp.float32)
    # deterministic param init (Conv1d weight shapes: [C_out, C_in, k])
    w1 = 0.1 * jax.random.normal(kw1, (d_hid, d_in, kernel_size[0]), dtype=jnp.float32)
    b1 = 0.1 * jax.random.normal(kb1, (d_hid,), dtype=jnp.float32)
    w2 = 0.1 * jax.random.normal(kw2, (d_in, d_hid, kernel_size[1]), dtype=jnp.float32)
    b2 = 0.1 * jax.random.normal(kb2, (d_in,), dtype=jnp.float32)
    gamma = jnp.ones((d_in,), dtype=jnp.float32)   # nn.LayerNorm default init
    beta = jnp.zeros((d_in,), dtype=jnp.float32)

    out = positionwise_ffn(x, w1, b1, w2, b2, gamma, beta)
    out = jax.block_until_ready(out)

    ref = _reference(x, w1, b1, w2, b2, gamma, beta)
    assert out.shape == (B, T, d_in)
    assert jnp.allclose(out, ref, atol=1e-4, rtol=1e-4), "mismatch vs reference"

    print("KERNEL_OK")
</pallas_src>

<mosaic_0001>
module attributes {stable_mosaic.version = 11 : i64} {
  func.func @_ffn_kernel(%arg0: i32, %arg1: i32, %arg2: memref<2x24x128xf32, #tpu.memory_space<any>>, %arg3: memref<1152x128xf32, #tpu.memory_space<vmem>>, %arg4: memref<1x128xf32, #tpu.memory_space<vmem>>, %arg5: memref<128x128xf32, #tpu.memory_space<vmem>>, %arg6: memref<1x128xf32, #tpu.memory_space<vmem>>, %arg7: memref<1x128xf32, #tpu.memory_space<vmem>>, %arg8: memref<1x128xf32, #tpu.memory_space<vmem>>, %arg9: memref<1x16x8xf32, #tpu.memory_space<vmem>>, %arg10: memref<24x128xf32, #tpu.memory_space<vmem>>, %arg11: memref<!tpu.dma_semaphore, #tpu.memory_space<semaphore_mem>>) attributes {dimension_semantics = [#tpu.dimension_semantics<parallel>, #tpu.dimension_semantics<parallel>], iteration_bounds = array<i64: 2, 1>, scalar_prefetch = 0 : i64, scratch_operands = 2 : i64, tpu.core_type = #tpu.core_type<tc>, window_params = [{}, {pipeline_mode = #tpu.pipeline_mode<synchronous>, transform_indices = @transform_1, window_bounds = array<i64: 1152, 128>}, {pipeline_mode = #tpu.pipeline_mode<synchronous>, transform_indices = @transform_2, window_bounds = array<i64: 1, 128>}, {pipeline_mode = #tpu.pipeline_mode<synchronous>, transform_indices = @transform_3, window_bounds = array<i64: 128, 128>}, {pipeline_mode = #tpu.pipeline_mode<synchronous>, transform_indices = @transform_4, window_bounds = array<i64: 1, 128>}, {pipeline_mode = #tpu.pipeline_mode<synchronous>, transform_indices = @transform_5, window_bounds = array<i64: 1, 128>}, {pipeline_mode = #tpu.pipeline_mode<synchronous>, transform_indices = @transform_6, window_bounds = array<i64: 1, 128>}, {transform_indices = @transform_7, window_bounds = array<i64: 1, 16, 8>}]} {
    %c16_i32 = arith.constant 16 : i32
    %0 = arith.muli %arg1, %c16_i32 : i32
    %1 = tpu.assume_multiple %0, 8 : i32
    %c0_i32 = arith.constant 0 : i32
    %2 = tpu.memref_slice %arg2[%arg0, %1, %c0_i32] : memref<2x24x128xf32, #tpu.memory_space<any>> -> memref<1x24x128xf32, #tpu.memory_space<any>>
    %3 = tpu.memref_squeeze %2 : memref<1x24x128xf32, #tpu.memory_space<any>> -> memref<24x128xf32, #tpu.memory_space<any>>
    tpu.enqueue_dma source(%3 : memref<24x128xf32, #tpu.memory_space<any>>) target(%arg10 : memref<24x128xf32, #tpu.memory_space<vmem>>) target_semaphore(%arg11 : memref<!tpu.dma_semaphore, #tpu.memory_space<semaphore_mem>>)
    %c0_i32_0 = arith.constant 0 : i32
    %4 = tpu.memref_slice %arg2[%arg0, %1, %c0_i32_0] : memref<2x24x128xf32, #tpu.memory_space<any>> -> memref<1x24x128xf32, #tpu.memory_space<any>>
    %5 = tpu.memref_squeeze %4 : memref<1x24x128xf32, #tpu.memory_space<any>> -> memref<24x128xf32, #tpu.memory_space<any>>
    tpu.wait_dma2 semaphore(%arg11 : memref<!tpu.dma_semaphore, #tpu.memory_space<semaphore_mem>>) src(%5 : memref<24x128xf32, #tpu.memory_space<any>>) dst(%arg10 : memref<24x128xf32, #tpu.memory_space<vmem>>)
    %c0 = arith.constant 0 : index
    %c0_1 = arith.constant 0 : index
    %6 = vector.load %arg10[%c0, %c0_1] : memref<24x128xf32, #tpu.memory_space<vmem>>, vector<24x128xf32>
    %c23_i32 = arith.constant 23 : i32
    %7 = tpu.dynamic_rotate %6 by %c23_i32 dim 0 : vector<24x128xf32>, i32 -> vector<24x128xf32>
    %c22_i32 = arith.constant 22 : i32
    %8 = tpu.dynamic_rotate %6 by %c22_i32 dim 0 : vector<24x128xf32>, i32 -> vector<24x128xf32>
    %c21_i32 = arith.constant 21 : i32
    %9 = tpu.dynamic_rotate %6 by %c21_i32 dim 0 : vector<24x128xf32>, i32 -> vector<24x128xf32>
    %c20_i32 = arith.constant 20 : i32
    %10 = tpu.dynamic_rotate %6 by %c20_i32 dim 0 : vector<24x128xf32>, i32 -> vector<24x128xf32>
    %c19_i32 = arith.constant 19 : i32
    %11 = tpu.dynamic_rotate %6 by %c19_i32 dim 0 : vector<24x128xf32>, i32 -> vector<24x128xf32>
    %c18_i32 = arith.constant 18 : i32
    %12 = tpu.dynamic_rotate %6 by %c18_i32 dim 0 : vector<24x128xf32>, i32 -> vector<24x128xf32>
    %c17_i32 = arith.constant 17 : i32
    %13 = tpu.dynamic_rotate %6 by %c17_i32 dim 0 : vector<24x128xf32>, i32 -> vector<24x128xf32>
    %c16_i32_2 = arith.constant 16 : i32
    %14 = tpu.dynamic_rotate %6 by %c16_i32_2 dim 0 : vector<24x128xf32>, i32 -> vector<24x128xf32>
    %15 = tpu.concatenate %6, %7, %8, %9, %10, %11, %12, %13, %14 in 1 : vector<24x128xf32>, vector<24x128xf32>, vector<24x128xf32>, vector<24x128xf32>, vector<24x128xf32>, vector<24x128xf32>, vector<24x128xf32>, vector<24x128xf32>, vector<24x128xf32> -> vector<24x1152xf32>
    %c0_3 = arith.constant 0 : index
    %c0_4 = arith.constant 0 : index
    %16 = vector.load %arg3[%c0_3, %c0_4] : memref<1152x128xf32, #tpu.memory_space<vmem>>, vector<1152x128xf32>
    %cst = arith.constant dense<0.000000e+00> : vector<24x128xf32>
    %17 = tpu.matmul %15, %16, %cst {dimension_numbers = #tpu.dot_dimension_numbers<[1], [0], [0], [1], [0, 0, 1, 1], [], []>} : vector<24x1152xf32>, vector<1152x128xf32>, vector<24x128xf32> -> vector<24x128xf32>
    %c0_5 = arith.constant 0 : index
    %c0_6 = arith.constant 0 : index
    %18 = vector.load %arg4[%c0_5, %c0_6] : memref<1x128xf32, #tpu.memory_space<vmem>>, vector<1x128xf32>
    %19 = vector.broadcast %18 : vector<1x128xf32> to vector<24x128xf32>
    %20 = arith.addf %17, %19 : vector<24x128xf32>
    %cst_7 = arith.constant 0.000000e+00 : f32
    %21 = vector.broadcast %cst_7 : f32 to vector<24x128xf32>
    %22 = arith.maximumf %20, %21 : vector<24x128xf32>
    %c0_8 = arith.constant 0 : index
    %c0_9 = arith.constant 0 : index
    %23 = vector.load %arg5[%c0_8, %c0_9] : memref<128x128xf32, #tpu.memory_space<vmem>>, vector<128x128xf32>
    %cst_10 = arith.constant dense<0.000000e+00> : vector<24x128xf32>
    %24 = tpu.matmul %22, %23, %cst_10 {dimension_numbers = #tpu.dot_dimension_numbers<[1], [0], [0], [1], [0, 0, 1, 1], [], []>} : vector<24x128xf32>, vector<128x128xf32>, vector<24x128xf32> -> vector<24x128xf32>
    %25 = vector.extract_strided_slice %24 {offsets = [0, 0], sizes = [16, 128], strides = [1, 1]} : vector<24x128xf32> to vector<16x128xf32>
    %c0_11 = arith.constant 0 : index
    %c0_12 = arith.constant 0 : index
    %26 = vector.load %arg6[%c0_11, %c0_12] : memref<1x128xf32, #tpu.memory_space<vmem>>, vector<1x128xf32>
    %27 = vector.broadcast %26 : vector<1x128xf32> to vector<16x128xf32>
    %28 = arith.addf %25, %27 : vector<16x128xf32>
    %29 = vector.extract_strided_slice %10 {offsets = [0, 0], sizes = [16, 128], strides = [1, 1]} : vector<24x128xf32> to vector<16x128xf32>
    %30 = arith.addf %28, %29 : vector<16x128xf32>
    %31 = tpu.iota {dimensions = array<i32: 1>} : vector<16x128xi32>
    %c8_i32 = arith.constant 8 : i32
    %32 = vector.broadcast %c8_i32 : i32 to vector<16x128xi32>
    %33 = arith.cmpi slt, %31, %32 : vector<16x128xi32>
    %cst_13 = arith.constant 0.000000e+00 : f32
    %34 = vector.broadcast %cst_13 : f32 to vector<16x128xf32>
    %35 = arith.select %33, %30, %34 : vector<16x128xi1>, vector<16x128xf32>
    %cst_14 = arith.constant dense<0.000000e+00> : vector<16xf32>
    %36 = vector.multi_reduction <add>, %35, %cst_14 [1] : vector<16x128xf32> to vector<16xf32>
    %37 = vector.shape_cast %36 : vector<16xf32> to vector<16x1xf32>
    %cst_15 = arith.constant 1.250000e-01 : f32
    %38 = vector.broadcast %cst_15 : f32 to vector<16x1xf32>
    %39 = arith.mulf %37, %38 : vector<16x1xf32>
    %40 = vector.broadcast %39 : vector<16x1xf32> to vector<16x128xf32>
    %41 = arith.subf %30, %40 : vector<16x128xf32>
    %cst_16 = arith.constant 0.000000e+00 : f32
    %42 = vector.broadcast %cst_16 : f32 to vector<16x128xf32>
    %43 = arith.select %33, %41, %42 : vector<16x128xi1>, vector<16x128xf32>
    %44 = arith.mulf %43, %43 : vector<16x128xf32>
    %cst_17 = arith.constant dense<0.000000e+00> : vector<16xf32>
    %45 = vector.multi_reduction <add>, %44, %cst_17 [1] : vector<16x128xf32> to vector<16xf32>
    %46 = vector.shape_cast %45 : vector<16xf32> to vector<16x1xf32>
    %cst_18 = arith.constant 1.250000e-01 : f32
    %47 = vector.broadcast %cst_18 : f32 to vector<16x1xf32>
    %48 = arith.mulf %46, %47 : vector<16x1xf32>
    %cst_19 = arith.constant 9.99999974E-6 : f32
    %49 = vector.broadcast %cst_19 : f32 to vector<16x1xf32>
    %50 = arith.addf %48, %49 : vector<16x1xf32>
    %51 = math.rsqrt %50 : vector<16x1xf32>
    %52 = vector.broadcast %51 : vector<16x1xf32> to vector<16x128xf32>
    %53 = arith.mulf %41, %52 : vector<16x128xf32>
    %c0_20 = arith.constant 0 : index
    %c0_21 = arith.constant 0 : index
    %54 = vector.load %arg7[%c0_20, %c0_21] : memref<1x128xf32, #tpu.memory_space<vmem>>, vector<1x128xf32>
    %55 = vector.broadcast %54 : vector<1x128xf32> to vector<16x128xf32>
    %56 = arith.mulf %53, %55 : vector<16x128xf32>
    %c0_22 = arith.constant 0 : index
    %c0_23 = arith.constant 0 : index
    %57 = vector.load %arg8[%c0_22, %c0_23] : memref<1x128xf32, #tpu.memory_space<vmem>>, vector<1x128xf32>
    %58 = vector.broadcast %57 : vector<1x128xf32> to vector<16x128xf32>
    %59 = arith.addf %56, %58 : vector<16x128xf32>
    %60 = vector.extract_strided_slice %59 {offsets = [0, 0], sizes = [16, 8], strides = [1, 1]} : vector<16x128xf32> to vector<16x8xf32>
    %c0_24 = arith.constant 0 : index
    %c0_25 = arith.constant 0 : index
    %c0_26 = arith.constant 0 : index
    %61 = vector.load %arg9[%c0_24, %c0_25, %c0_26] : memref<1x16x8xf32, #tpu.memory_space<vmem>>, vector<1x16x8xf32>
    %62 = vector.shape_cast %61 : vector<1x16x8xf32> to vector<16x8xf32>
    %63 = vector.shape_cast %60 : vector<16x8xf32> to vector<1x16x8xf32>
    tpu.vector_store %arg9[%c0_24, %c0_25, %c0_26], %63 {strides = array<i32>} : memref<1x16x8xf32, #tpu.memory_space<vmem>>, vector<1x16x8xf32>,
    return
  }
  func.func @transform_1(%arg0: i32, %arg1: i32) -> (i32, i32) {
    %c0_i32 = arith.constant 0 : i32
    %c0_i32_0 = arith.constant 0 : i32
    %c0_i32_1 = arith.constant 0 : i32
    return %c0_i32, %c0_i32_0 : i32, i32
  }
  func.func @transform_2(%arg0: i32, %arg1: i32) -> (i32, i32) {
    %c0_i32 = arith.constant 0 : i32
    %c0_i32_0 = arith.constant 0 : i32
    %c0_i32_1 = arith.constant 0 : i32
    return %c0_i32, %c0_i32_0 : i32, i32
  }
  func.func @transform_3(%arg0: i32, %arg1: i32) -> (i32, i32) {
    %c0_i32 = arith.constant 0 : i32
    %c0_i32_0 = arith.constant 0 : i32
    %c0_i32_1 = arith.constant 0 : i32
    return %c0_i32, %c0_i32_0 : i32, i32
  }
  func.func @transform_4(%arg0: i32, %arg1: i32) -> (i32, i32) {
    %c0_i32 = arith.constant 0 : i32
    %c0_i32_0 = arith.constant 0 : i32
    %c0_i32_1 = arith.constant 0 : i32
    return %c0_i32, %c0_i32_0 : i32, i32
  }
  func.func @transform_5(%arg0: i32, %arg1: i32) -> (i32, i32) {
    %c0_i32 = arith.constant 0 : i32
    %c0_i32_0 = arith.constant 0 : i32
    %c0_i32_1 = arith.constant 0 : i32
    return %c0_i32, %c0_i32_0 : i32, i32
  }
  func.func @transform_6(%arg0: i32, %arg1: i32) -> (i32, i32) {
    %c0_i32 = arith.constant 0 : i32
    %c0_i32_0 = arith.constant 0 : i32
    %c0_i32_1 = arith.constant 0 : i32
    return %c0_i32, %c0_i32_0 : i32, i32
  }
  func.func @transform_7(%arg0: i32, %arg1: i32) -> (i32, i32, i32) {
    %c0_i32 = arith.constant 0 : i32
    %c0_i32_0 = arith.constant 0 : i32
    return %arg0, %arg1, %c0_i32 : i32, i32, i32
  }
}

module attributes {stable_mosaic.version = 11 : i64} {
  func.func @_ffn_kernel(%arg0: i32, %arg1: i32, %arg2: memref<2x24x128xf32, #tpu.memory_space<any>>, %arg3: memref<1152x128xf32, #tpu.memory_space<vmem>>, %arg4: memref<1x128xf32, #tpu.memory_space<vmem>>, %arg5: memref<128x128xf32, #tpu.memory_space<vmem>>, %arg6: memref<1x128xf32, #tpu.memory_space<vmem>>, %arg7: memref<1x128xf32, #tpu.memory_space<vmem>>, %arg8: memref<1x128xf32, #tpu.memory_space<vmem>>, %arg9: memref<1x16x8xf32, #tpu.memory_space<vmem>>, %arg10: memref<24x128xf32, #tpu.memory_space<vmem>>, %arg11: memref<!tpu.dma_semaphore, #tpu.memory_space<semaphore_mem>>) attributes {dimension_semantics = [#tpu.dimension_semantics<parallel>, #tpu.dimension_semantics<parallel>], iteration_bounds = array<i64: 2, 1>, scalar_prefetch = 0 : i64, scratch_operands = 2 : i64, tpu.core_type = #tpu.core_type<tc>, window_params = [{}, {pipeline_mode = #tpu.pipeline_mode<synchronous>, transform_indices = @transform_1, window_bounds = array<i64: 1152, 128>}, {pipeline_mode = #tpu.pipeline_mode<synchronous>, transform_indices = @transform_2, window_bounds = array<i64: 1, 128>}, {pipeline_mode = #tpu.pipeline_mode<synchronous>, transform_indices = @transform_3, window_bounds = array<i64: 128, 128>}, {pipeline_mode = #tpu.pipeline_mode<synchronous>, transform_indices = @transform_4, window_bounds = array<i64: 1, 128>}, {pipeline_mode = #tpu.pipeline_mode<synchronous>, transform_indices = @transform_5, window_bounds = array<i64: 1, 128>}, {pipeline_mode = #tpu.pipeline_mode<synchronous>, transform_indices = @transform_6, window_bounds = array<i64: 1, 128>}, {transform_indices = @transform_7, window_bounds = array<i64: 1, 16, 8>}]} {
    %c16_i32 = arith.constant 16 : i32
    %0 = arith.muli %arg1, %c16_i32 : i32
    %1 = tpu.assume_multiple %0, 8 : i32
    %c0_i32 = arith.constant 0 : i32
    %2 = tpu.memref_slice %arg2[%arg0, %1, %c0_i32] : memref<2x24x128xf32, #tpu.memory_space<any>> -> memref<1x24x128xf32, #tpu.memory_space<any>>
    %3 = tpu.memref_squeeze %2 : memref<1x24x128xf32, #tpu.memory_space<any>> -> memref<24x128xf32, #tpu.memory_space<any>>
    tpu.enqueue_dma source(%3 : memref<24x128xf32, #tpu.memory_space<any>>) target(%arg10 : memref<24x128xf32, #tpu.memory_space<vmem>>) target_semaphore(%arg11 : memref<!tpu.dma_semaphore, #tpu.memory_space<semaphore_mem>>)
    %c0_i32_0 = arith.constant 0 : i32
    %4 = tpu.memref_slice %arg2[%arg0, %1, %c0_i32_0] : memref<2x24x128xf32, #tpu.memory_space<any>> -> memref<1x24x128xf32, #tpu.memory_space<any>>
    %5 = tpu.memref_squeeze %4 : memref<1x24x128xf32, #tpu.memory_space<any>> -> memref<24x128xf32, #tpu.memory_space<any>>
    tpu.wait_dma2 semaphore(%arg11 : memref<!tpu.dma_semaphore, #tpu.memory_space<semaphore_mem>>) src(%5 : memref<24x128xf32, #tpu.memory_space<any>>) dst(%arg10 : memref<24x128xf32, #tpu.memory_space<vmem>>)
    %c0 = arith.constant 0 : index
    %c0_1 = arith.constant 0 : index
    %6 = vector.load %arg10[%c0, %c0_1] : memref<24x128xf32, #tpu.memory_space<vmem>>, vector<24x128xf32>
    %c23_i32 = arith.constant 23 : i32
    %7 = tpu.dynamic_rotate %6 by %c23_i32 dim 0 : vector<24x128xf32>, i32 -> vector<24x128xf32>
    %c22_i32 = arith.constant 22 : i32
    %8 = tpu.dynamic_rotate %6 by %c22_i32 dim 0 : vector<24x128xf32>, i32 -> vector<24x128xf32>
    %c21_i32 = arith.constant 21 : i32
    %9 = tpu.dynamic_rotate %6 by %c21_i32 dim 0 : vector<24x128xf32>, i32 -> vector<24x128xf32>
    %c20_i32 = arith.constant 20 : i32
    %10 = tpu.dynamic_rotate %6 by %c20_i32 dim 0 : vector<24x128xf32>, i32 -> vector<24x128xf32>
    %c19_i32 = arith.constant 19 : i32
    %11 = tpu.dynamic_rotate %6 by %c19_i32 dim 0 : vector<24x128xf32>, i32 -> vector<24x128xf32>
    %c18_i32 = arith.constant 18 : i32
    %12 = tpu.dynamic_rotate %6 by %c18_i32 dim 0 : vector<24x128xf32>, i32 -> vector<24x128xf32>
    %c17_i32 = arith.constant 17 : i32
    %13 = tpu.dynamic_rotate %6 by %c17_i32 dim 0 : vector<24x128xf32>, i32 -> vector<24x128xf32>
    %c16_i32_2 = arith.constant 16 : i32
    %14 = tpu.dynamic_rotate %6 by %c16_i32_2 dim 0 : vector<24x128xf32>, i32 -> vector<24x128xf32>
    %15 = tpu.concatenate %6, %7, %8, %9, %10, %11, %12, %13, %14 in 1 : vector<24x128xf32>, vector<24x128xf32>, vector<24x128xf32>, vector<24x128xf32>, vector<24x128xf32>, vector<24x128xf32>, vector<24x128xf32>, vector<24x128xf32>, vector<24x128xf32> -> vector<24x1152xf32>
    %c0_3 = arith.constant 0 : index
    %c0_4 = arith.constant 0 : index
    %16 = vector.load %arg3[%c0_3, %c0_4] : memref<1152x128xf32, #tpu.memory_space<vmem>>, vector<1152x128xf32>
    %cst = arith.constant dense<0.000000e+00> : vector<24x128xf32>
    %17 = tpu.matmul %15, %16, %cst {dimension_numbers = #tpu.dot_dimension_numbers<[1], [0], [0], [1], [0, 0, 1, 1], [], []>} : vector<24x1152xf32>, vector<1152x128xf32>, vector<24x128xf32> -> vector<24x128xf32>
    %c0_5 = arith.constant 0 : index
    %c0_6 = arith.constant 0 : index
    %18 = vector.load %arg4[%c0_5, %c0_6] : memref<1x128xf32, #tpu.memory_space<vmem>>, vector<1x128xf32>
    %19 = vector.broadcast %18 : vector<1x128xf32> to vector<24x128xf32>
    %20 = arith.addf %17, %19 : vector<24x128xf32>
    %cst_7 = arith.constant 0.000000e+00 : f32
    %21 = vector.broadcast %cst_7 : f32 to vector<24x128xf32>
    %22 = arith.maximumf %20, %21 : vector<24x128xf32>
    %c0_8 = arith.constant 0 : index
    %c0_9 = arith.constant 0 : index
    %23 = vector.load %arg5[%c0_8, %c0_9] : memref<128x128xf32, #tpu.memory_space<vmem>>, vector<128x128xf32>
    %cst_10 = arith.constant dense<0.000000e+00> : vector<24x128xf32>
    %24 = tpu.matmul %22, %23, %cst_10 {dimension_numbers = #tpu.dot_dimension_numbers<[1], [0], [0], [1], [0, 0, 1, 1], [], []>} : vector<24x128xf32>, vector<128x128xf32>, vector<24x128xf32> -> vector<24x128xf32>
    %25 = vector.extract_strided_slice %24 {offsets = [0, 0], sizes = [16, 128], strides = [1, 1]} : vector<24x128xf32> to vector<16x128xf32>
    %c0_11 = arith.constant 0 : index
    %c0_12 = arith.constant 0 : index
    %26 = vector.load %arg6[%c0_11, %c0_12] : memref<1x128xf32, #tpu.memory_space<vmem>>, vector<1x128xf32>
    %27 = vector.broadcast %26 : vector<1x128xf32> to vector<16x128xf32>
    %28 = arith.addf %25, %27 : vector<16x128xf32>
    %29 = vector.extract_strided_slice %10 {offsets = [0, 0], sizes = [16, 128], strides = [1, 1]} : vector<24x128xf32> to vector<16x128xf32>
    %30 = arith.addf %28, %29 : vector<16x128xf32>
    %31 = tpu.iota {dimensions = array<i32: 1>} : vector<16x128xi32>
    %c8_i32 = arith.constant 8 : i32
    %32 = vector.broadcast %c8_i32 : i32 to vector<16x128xi32>
    %33 = arith.cmpi slt, %31, %32 : vector<16x128xi32>
    %cst_13 = arith.constant 0.000000e+00 : f32
    %34 = vector.broadcast %cst_13 : f32 to vector<16x128xf32>
    %35 = arith.select %33, %30, %34 : vector<16x128xi1>, vector<16x128xf32>
    %cst_14 = arith.constant dense<0.000000e+00> : vector<16xf32>
    %36 = vector.multi_reduction <add>, %35, %cst_14 [1] : vector<16x128xf32> to vector<16xf32>
    %37 = vector.shape_cast %36 : vector<16xf32> to vector<16x1xf32>
    %cst_15 = arith.constant 1.250000e-01 : f32
    %38 = vector.broadcast %cst_15 : f32 to vector<16x1xf32>
    %39 = arith.mulf %37, %38 : vector<16x1xf32>
    %40 = vector.broadcast %39 : vector<16x1xf32> to vector<16x128xf32>
    %41 = arith.subf %30, %40 : vector<16x128xf32>
    %cst_16 = arith.constant 0.000000e+00 : f32
    %42 = vector.broadcast %cst_16 : f32 to vector<16x128xf32>
    %43 = arith.select %33, %41, %42 : vector<16x128xi1>, vector<16x128xf32>
    %44 = arith.mulf %43, %43 : vector<16x128xf32>
    %cst_17 = arith.constant dense<0.000000e+00> : vector<16xf32>
    %45 = vector.multi_reduction <add>, %44, %cst_17 [1] : vector<16x128xf32> to vector<16xf32>
    %46 = vector.shape_cast %45 : vector<16xf32> to vector<16x1xf32>
    %cst_18 = arith.constant 1.250000e-01 : f32
    %47 = vector.broadcast %cst_18 : f32 to vector<16x1xf32>
    %48 = arith.mulf %46, %47 : vector<16x1xf32>
    %cst_19 = arith.constant 9.99999974E-6 : f32
    %49 = vector.broadcast %cst_19 : f32 to vector<16x1xf32>
    %50 = arith.addf %48, %49 : vector<16x1xf32>
    %51 = math.rsqrt %50 : vector<16x1xf32>
    %52 = vector.broadcast %51 : vector<16x1xf32> to vector<16x128xf32>
    %53 = arith.mulf %41, %52 : vector<16x128xf32>
    %c0_20 = arith.constant 0 : index
    %c0_21 = arith.constant 0 : index
    %54 = vector.load %arg7[%c0_20, %c0_21] : memref<1x128xf32, #tpu.memory_space<vmem>>, vector<1x128xf32>
    %55 = vector.broadcast %54 : vector<1x128xf32> to vector<16x128xf32>
    %56 = arith.mulf %53, %55 : vector<16x128xf32>
    %c0_22 = arith.constant 0 : index
    %c0_23 = arith.constant 0 : index
    %57 = vector.load %arg8[%c0_22, %c0_23] : memref<1x128xf32, #tpu.memory_space<vmem>>, vector<1x128xf32>
    %58 = vector.broadcast %57 : vector<1x128xf32> to vector<16x128xf32>
    %59 = arith.addf %56, %58 : vector<16x128xf32>
    %60 = vector.extract_strided_slice %59 {offsets = [0, 0], sizes = [16, 8], strides = [1, 1]} : vector<16x128xf32> to vector<16x8xf32>
    %c0_24 = arith.constant 0 : index
    %c0_25 = arith.constant 0 : index
    %c0_26 = arith.constant 0 : index
    %61 = vector.load %arg9[%c0_24, %c0_25, %c0_26] : memref<1x16x8xf32, #tpu.memory_space<vmem>>, vector<1x16x8xf32>
    %62 = vector.shape_cast %61 : vector<1x16x8xf32> to vector<16x8xf32>
    %63 = vector.shape_cast %60 : vector<16x8xf32> to vector<1x16x8xf32>
    tpu.vector_store %arg9[%c0_24, %c0_25, %c0_26], %63 {strides = array<i32>} : memref<1x16x8xf32, #tpu.memory_space<vmem>>, vector<1x16x8xf32>,
    return
  }
  func.func @transform_1(%arg0: i32, %arg1: i32) -> (i32, i32) {
    %c0_i32 = arith.constant 0 : i32
    %c0_i32_0 = arith.constant 0 : i32
    %c0_i32_1 = arith.constant 0 : i32
    return %c0_i32, %c0_i32_0 : i32, i32
  }
  func.func @transform_2(%arg0: i32, %arg1: i32) -> (i32, i32) {
    %c0_i32 = arith.constant 0 : i32
    %c0_i32_0 = arith.constant 0 : i32
    %c0_i32_1 = arith.constant 0 : i32
    return %c0_i32, %c0_i32_0 : i32, i32
  }
  func.func @transform_3(%arg0: i32, %arg1: i32) -> (i32, i32) {
    %c0_i32 = arith.constant 0 : i32
    %c0_i32_0 = arith.constant 0 : i32
    %c0_i32_1 = arith.constant 0 : i32
    return %c0_i32, %c0_i32_0 : i32, i32
  }
  func.func @transform_4(%arg0: i32, %arg1: i32) -> (i32, i32) {
    %c0_i32 = arith.constant 0 : i32
    %c0_i32_0 = arith.constant 0 : i32
    %c0_i32_1 = arith.constant 0 : i32
    return %c0_i32, %c0_i32_0 : i32, i32
  }
  func.func @transform_5(%arg0: i32, %arg1: i32) -> (i32, i32) {
    %c0_i32 = arith.constant 0 : i32
    %c0_i32_0 = arith.constant 0 : i32
    %c0_i32_1 = arith.constant 0 : i32
    return %c0_i32, %c0_i32_0 : i32, i32
  }
  func.func @transform_6(%arg0: i32, %arg1: i32) -> (i32, i32) {
    %c0_i32 = arith.constant 0 : i32
    %c0_i32_0 = arith.constant 0 : i32
    %c0_i32_1 = arith.constant 0 : i32
    return %c0_i32, %c0_i32_0 : i32, i32
  }
  func.func @transform_7(%arg0: i32, %arg1: i32) -> (i32, i32, i32) {
    %c0_i32 = arith.constant 0 : i32
    %c0_i32_0 = arith.constant 0 : i32
    return %arg0, %arg1, %c0_i32 : i32, i32, i32
  }
}

</mosaic_0001>

<llo_original>
// kernel: tpu_custom_call.1
$region0: #{tpu_custom_call.1}
  #allocation0 [shape = 'u32[]', space=smem, size = 0x4, offset = 0x4, fixed_abs, tag = 'smem constant byte address 0x4 - core index']
  #allocation1 [shape = 'u32[72,128]{1,0:T(1,128)}', space=vmem, size = 0x9000, scoped, tag = 'internal scratch']
  #allocation2 [shape = 'f32[24,128]{1,0:T(8,128)}', space=vmem, size = 0x3000, scoped, tag = 'scratch operand']
  #allocation3 [shape = 's32[1]{0}', space=sflag, size = 0x4, scoped, tag = 'scratch operand']
  #allocation8 [shape = 's32[]', space=sflag, size = 0x4, offset = 0, fixed_abs, tag = 'sflag constant byte address 0x0 - dummy sync flag']
  #allocation9 [shape = 's32[]', space=sflag, size = 0x4, offset = 0, fixed_abs, tag = 'sflag constant byte address 0x0 - dummy sync flag']
  #allocation10 [shape = 'u32[]', space=smem, size = 0x4, offset = 0x44, fixed_abs, tag = 'smem constant byte address 0x44 - assertion arg 0']
  #allocation11 [shape = 'u32[]', space=smem, size = 0x4, offset = 0x48, fixed_abs, tag = 'smem constant byte address 0x48 - assertion arg 1']
  %s0 = inlined_call_operand.hbm [shape: f32[2,24,128], index: 0, kind: input, shape index: {}]
  %s1 = inlined_call_operand.hbm [shape: f32[1152,128], index: 1, kind: input, shape index: {}]
  %s2 = inlined_call_operand.vmem [shape: f32[1,128], index: 2, kind: input, shape index: {}]
  %s3 = inlined_call_operand.hbm [shape: f32[128,128], index: 3, kind: input, shape index: {}]
  %s4 = inlined_call_operand.vmem [shape: f32[1,128], index: 4, kind: input, shape index: {}]
  %s5 = inlined_call_operand.vmem [shape: f32[1,128], index: 5, kind: input, shape index: {}]
  %s6 = inlined_call_operand.vmem [shape: f32[1,128], index: 6, kind: input, shape index: {}]
  %s7 = inlined_call_operand.vmem [shape: f32[2,16,8], index: 7, kind: output, shape index: {}]
  %s8 = sld [smem:[#allocation0]]
  $region69: #{tpu_custom_call.1} parent=0
    _
  %s10 = ssub.s32 1, %s8
  %s11 = scalar_select 0, %s10, %s8
  $region1: #{tpu_custom_call.1} parent=0
    #allocation4 [shape = 'u8[589824]{0}', space=vmem, size = 0x90000, scoped, tag = 'input window, operand 1, single buffered']
    #allocation5 [shape = 's32[2]{0}', space=sflag, size = 0x8, scoped, tag = 'scoped memory for tpu_custom_call.1']
    #allocation6 [shape = 'u8[65536]{0}', space=vmem, size = 0x10000, scoped, tag = 'input window, operand 3, single buffered']
    #allocation7 [shape = 's32[1]{0}', space=sflag, size = 0x4, scoped, tag = 'scoped memory for tpu_custom_call.1']
    %12 = vsyncpa [#allocation5], 0
    %13 = vsyncpa [#allocation7], 0
    loop: start=0, step=1, limit=4
    $region2: #{tpu_custom_call.1} parent=1 // loop_pre_header
      _
    $region3: #{tpu_custom_call.1} parent=1 // loop_header
      %s15 = sphi 0, %s19
      %p16 = scmp.ge.s32.totalorder %s15, 4
      %s22 = sphi 0, %s34
      %s23 = sphi 0, %s30
      %s24 = sphi 0, %s22
      %s25 = sphi 0, %s23
      %s26 = sphi 0, %s24
      %s27 = sphi 0, %s25
      %s35 = sphi 0, %s35
      %s37 = sphi 0, %s35
      %s38 = sphi 0, %s37
      %s52 = sphi 0, %s38
      %s56 = sphi 0, %s56
      %s58 = sphi 0, %s56
      %s59 = sphi 0, %s58
      %s73 = sphi 0, %s59
      %s77 = sphi 0, %s77
      %s79 = sphi 0, %s77
      %s80 = sphi 0, %s79
      %s94 = sphi 0, %s80
      %s98 = sphi 0, %s98
      %s100 = sphi 0, %s98
      %s101 = sphi 0, %s100
      %s115 = sphi 0, %s101
      %s119 = sphi 0, %s119
      %s121 = sphi 0, %s119
      %s122 = sphi 0, %s121
      %s136 = sphi 0, %s122
      %s140 = sphi 0, %s140
      %s142 = sphi 0, %s140
      %s143 = sphi 0, %s142
      %s157 = sphi 0, %s143
      %s165 = sphi 0, %s167
      %s168 = sphi 0, %s165
      %s169 = sphi 0, %s168
      %s185 = sphi 0, %s169
    $region4: #{tpu_custom_call.1} parent=1 // loop_header_branch
      %18 = sbr.rel (%p16) target = $region8
    $region5: #{tpu_custom_call.1} parent=1 // loop_body
      %s20 = ssub.s32 %s15, 1
      %s21 = ssub.s32 %s15, 2
      %s28 = sadd.s32 1, %s23
      %p29 = scmp.ge.s32.totalorder %s28, 1
      %s30 = scalar_select %p29, 0, %s28
      %s31 = sadd.s32 1, %s22
      %s32 = scalar_select %p29, %s31, %s22
      %p33 = scmp.ge.s32.totalorder %s32, 2
      %s34 = scalar_select %p33, 0, %s32
      %s36 = sadd.s32 %s35, 1
      %p39 = scmp.eq.s32.totalorder %s15, 1
      %p40 = scmp.ne.s32.totalorder %s35, %s37
      %p41 = scmp.eq.s32.totalorder %s15, 0
      %p42 = por %p40, %p41
      %p43 = scmp.ne.s32.totalorder %s35, %s37
      %p44 = scmp.eq.s32.totalorder %s20, 1
      %p45 = por %p43, %p44
      %p46 = scmp.ne.s32.totalorder %s37, %s38
      %p47 = scmp.eq.s32.totalorder %s20, 0
      %p48 = por %p46, %p47
      %p49 = scmp.ne.s32.totalorder %s37, %s38
      %p50 = scmp.eq.s32.totalorder %s21, 1
      %p51 = por %p49, %p50
      %p53 = scmp.ne.s32.totalorder %s38, %s52
      %p54 = scmp.eq.s32.totalorder %s21, 0
      %p55 = por %p53, %p54
      %s57 = sadd.s32 %s56, 1
      %p60 = scmp.eq.s32.totalorder %s15, 1
      %p61 = scmp.ne.s32.totalorder %s56, %s58
      %p62 = scmp.eq.s32.totalorder %s15, 0
      %p63 = por %p61, %p62
      %p64 = scmp.ne.s32.totalorder %s56, %s58
      %p65 = scmp.eq.s32.totalorder %s20, 1
      %p66 = por %p64, %p65
      %p67 = scmp.ne.s32.totalorder %s58, %s59
      %p68 = scmp.eq.s32.totalorder %s20, 0
      %p69 = por %p67, %p68
      %p70 = scmp.ne.s32.totalorder %s58, %s59
      %p71 = scmp.eq.s32.totalorder %s21, 1
      %p72 = por %p70, %p71
      %p74 = scmp.ne.s32.totalorder %s59, %s73
      %p75 = scmp.eq.s32.totalorder %s21, 0
      %p76 = por %p74, %p75
      %s78 = sadd.s32 %s77, 1
      %p81 = scmp.eq.s32.totalorder %s15, 1
      %p82 = scmp.ne.s32.totalorder %s77, %s79
      %p83 = scmp.eq.s32.totalorder %s15, 0
      %p84 = por %p82, %p83
      %p85 = scmp.ne.s32.totalorder %s77, %s79
      %p86 = scmp.eq.s32.totalorder %s20, 1
      %p87 = por %p85, %p86
      %p88 = scmp.ne.s32.totalorder %s79, %s80
      %p89 = scmp.eq.s32.totalorder %s20, 0
      %p90 = por %p88, %p89
      %p91 = scmp.ne.s32.totalorder %s79, %s80
      %p92 = scmp.eq.s32.totalorder %s21, 1
      %p93 = por %p91, %p92
      %p95 = scmp.ne.s32.totalorder %s80, %s94
      %p96 = scmp.eq.s32.totalorder %s21, 0
      %p97 = por %p95, %p96
      %s99 = sadd.s32 %s98, 1
      %p102 = scmp.eq.s32.totalorder %s15, 1
      %p103 = scmp.ne.s32.totalorder %s98, %s100
      %p104 = scmp.eq.s32.totalorder %s15, 0
      %p105 = por %p103, %p104
      %p106 = scmp.ne.s32.totalorder %s98, %s100
      %p107 = scmp.eq.s32.totalorder %s20, 1
      %p108 = por %p106, %p107
      %p109 = scmp.ne.s32.totalorder %s100, %s101
      %p110 = scmp.eq.s32.totalorder %s20, 0
      %p111 = por %p109, %p110
      %p112 = scmp.ne.s32.totalorder %s100, %s101
      %p113 = scmp.eq.s32.totalorder %s21, 1
      %p114 = por %p112, %p113
      %p116 = scmp.ne.s32.totalorder %s101, %s115
      %p117 = scmp.eq.s32.totalorder %s21, 0
      %p118 = por %p116, %p117
      %s120 = sadd.s32 %s119, 1
      %p123 = scmp.eq.s32.totalorder %s15, 1
      %p124 = scmp.ne.s32.totalorder %s119, %s121
      %p125 = scmp.eq.s32.totalorder %s15, 0
      %p126 = por %p124, %p125
      %p127 = scmp.ne.s32.totalorder %s119, %s121
      %p128 = scmp.eq.s32.totalorder %s20, 1
      %p129 = por %p127, %p128
      %p130 = scmp.ne.s32.totalorder %s121, %s122
      %p131 = scmp.eq.s32.totalorder %s20, 0
      %p132 = por %p130, %p131
      %p133 = scmp.ne.s32.totalorder %s121, %s122
      %p134 = scmp.eq.s32.totalorder %s21, 1
      %p135 = por %p133, %p134
      %p137 = scmp.ne.s32.totalorder %s122, %s136
      %p138 = scmp.eq.s32.totalorder %s21, 0
      %p139 = por %p137, %p138
      %s141 = sadd.s32 %s140, 1
      %p144 = scmp.eq.s32.totalorder %s15, 1
      %p145 = scmp.ne.s32.totalorder %s140, %s142
      %p146 = scmp.eq.s32.totalorder %s15, 0
      %p147 = por %p145, %p146
      %p148 = scmp.ne.s32.totalorder %s140, %s142
      %p149 = scmp.eq.s32.totalorder %s20, 1
      %p150 = por %p148, %p149
      %p151 = scmp.ne.s32.totalorder %s142, %s143
      %p152 = scmp.eq.s32.totalorder %s20, 0
      %p153 = por %p151, %p152
      %p154 = scmp.ne.s32.totalorder %s142, %s143
      %p155 = scmp.eq.s32.totalorder %s21, 1
      %p156 = por %p154, %p155
      %p158 = scmp.ne.s32.totalorder %s143, %s157
      %p159 = scmp.eq.s32.totalorder %s21, 0
      %p160 = por %p158, %p159
      %s161 = ssub.s32 %s22, %s34
      %s162 = ssub.s32 %s23, %s30
      %s163 = sor.u32 %s161, %s162
      %p164 = scmp.eq.s32.totalorder %s163, 0
      %s166 = sadd.s32 %s165, 1
      %s167 = scalar_select %p164, %s165, %s166
      %p170 = pneg %p164
      %p171 = scmp.eq.s32.totalorder %s15, 1
      %p172 = por %p170, %p171
      %p173 = scmp.ne.s32.totalorder %s165, %s168
      %p174 = scmp.eq.s32.totalorder %s15, 0
      %p175 = por %p173, %p174
      %p176 = scmp.ne.s32.totalorder %s165, %s168
      %p177 = scmp.eq.s32.totalorder %s20, 1
      %p178 = por %p176, %p177
      %p179 = scmp.ne.s32.totalorder %s168, %s169
      %p180 = scmp.eq.s32.totalorder %s20, 0
      %p181 = por %p179, %p180
      %p182 = scmp.ne.s32.totalorder %s168, %s169
      %p183 = scmp.eq.s32.totalorder %s21, 1
      %p184 = por %p182, %p183
      %p186 = scmp.ne.s32.totalorder %s169, %s185
      %p187 = scmp.eq.s32.totalorder %s21, 0
      %p188 = por %p186, %p187
      %p189 = scmp.le.s32.totalorder 1, %s15
      %p190 = scmp.lt.s32.totalorder %s15, 3
      %p191 = pnand %p189, %p190
      %p192 = pneg %p191
      // Predicated region
      $region9: #{tpu_custom_call.1} parent=5 // pred_check
        _
      $region10: #{tpu_custom_call.1} parent=5 // pred_check_branch
        %194 = sbr.rel (%p191) target = $region12
      $region11: #{tpu_custom_call.1} parent=5 // pred_region
        %s195 = ssub.s32 %s15, 1
        // Predicated region
        $region13: #{tpu_custom_call.1} parent=11 // pred_check
          %p196 = pneg %p48
        $region14: #{tpu_custom_call.1} parent=11 // pred_check_branch
          %198 = sbr.rel (%p196) target = $region16
        $region15: #{tpu_custom_call.1} parent=11 // pred_region
          %200 = vsyncadd [#allocation5], 0
          %s201 = sshll.u32 %s1, 4
          %s202 = int_to_ptr.hbm [resolvable:$true] %s201
          %s203 = sshll.u32 [#allocation4], 4
          %s204 = int_to_ptr.vmem [resolvable:$true] %s203
          %209 = dma.hbm_to_vmem [thread:$0]  %s202, 18432, %s204, [#allocation5], 128, 128, 8
        $region16: #{tpu_custom_call.1} parent=11 // pred_fallthru
          _
        // Predicated region
        $region17: #{tpu_custom_call.1} parent=11 // pred_check
          %p210 = pneg %p69
        $region18: #{tpu_custom_call.1} parent=11 // pred_check_branch
          %212 = sbr.rel (%p210) target = $region20
        $region19: #{tpu_custom_call.1} parent=11 // pred_region
          _
        $region20: #{tpu_custom_call.1} parent=11 // pred_fallthru
          _
        // Predicated region
        $region21: #{tpu_custom_call.1} parent=11 // pred_check
          %p213 = pneg %p90
        $region22: #{tpu_custom_call.1} parent=11 // pred_check_branch
          %215 = sbr.rel (%p213) target = $region24
        $region23: #{tpu_custom_call.1} parent=11 // pred_region
          %217 = vsyncadd [#allocation7], 0
          %s218 = sshll.u32 %s3, 4
          %s219 = int_to_ptr.hbm [resolvable:$true] %s218
          %s220 = sshll.u32 [#allocation6], 4
          %s221 = int_to_ptr.vmem [resolvable:$true] %s220
          %226 = dma.hbm_to_vmem [thread:$0]  %s219, 2048, %s221, [#allocation7], 128, 128, 8
        $region24: #{tpu_custom_call.1} parent=11 // pred_fallthru
          _
        // Predicated region
        $region25: #{tpu_custom_call.1} parent=11 // pred_check
          %p227 = pneg %p111
        $region26: #{tpu_custom_call.1} parent=11 // pred_check_branch
          %229 = sbr.rel (%p227) target = $region28
        $region27: #{tpu_custom_call.1} parent=11 // pred_region
          _
        $region28: #{tpu_custom_call.1} parent=11 // pred_fallthru
          _
        // Predicated region
        $region29: #{tpu_custom_call.1} parent=11 // pred_check
          %p230 = pneg %p132
        $region30: #{tpu_custom_call.1} parent=11 // pred_check_branch
          %232 = sbr.rel (%p230) target = $region32
        $region31: #{tpu_custom_call.1} parent=11 // pred_region
          _
        $region32: #{tpu_custom_call.1} parent=11 // pred_fallthru
          _
        // Predicated region
        $region33: #{tpu_custom_call.1} parent=11 // pred_check
          %p233 = pneg %p153
        $region34: #{tpu_custom_call.1} parent=11 // pred_check_branch
          %235 = sbr.rel (%p233) target = $region36
        $region35: #{tpu_custom_call.1} parent=11 // pred_region
          _
        $region36: #{tpu_custom_call.1} parent=11 // pred_fallthru
          _
      $region12: #{tpu_custom_call.1} parent=5 // pred_fallthru
        _
      %p236 = scmp.lt.s32.totalorder %s15, 2
      // Predicated region
      $region37: #{tpu_custom_call.1} parent=5 // pred_check
        %p237 = pneg %p236
      $region38: #{tpu_custom_call.1} parent=5 // pred_check_branch
        %239 = sbr.rel (%p237) target = $region40
      $region39: #{tpu_custom_call.1} parent=5 // pred_region
        _
      $region40: #{tpu_custom_call.1} parent=5 // pred_fallthru
        _
      %p240 = scmp.le.s32.totalorder 1, %s15
      %p241 = scmp.lt.s32.totalorder %s15, 3
      %p242 = pnand %p240, %p241
      %p243 = pneg %p242
      // Predicated region
      $region41: #{tpu_custom_call.1} parent=5 // pred_check
        _
      $region42: #{tpu_custom_call.1} parent=5 // pred_check_branch
        %245 = sbr.rel (%p242) target = $region44
      $region43: #{tpu_custom_call.1} parent=5 // pred_region
        %s246 = ssub.s32 %s15, 1
        // Predicated region
        $region45: #{tpu_custom_call.1} parent=43 // pred_check
          %p247 = pneg %p48
        $region46: #{tpu_custom_call.1} parent=43 // pred_check_branch
          %249 = sbr.rel (%p247) target = $region48
        $region47: #{tpu_custom_call.1} parent=43 // pred_region
          %251 = dma.done [#allocation5], 18432
        $region48: #{tpu_custom_call.1} parent=43 // pred_fallthru
          _
        // Predicated region
        $region49: #{tpu_custom_call.1} parent=43 // pred_check
          %p252 = pneg %p90
        $region50: #{tpu_custom_call.1} parent=43 // pred_check_branch
          %254 = sbr.rel (%p252) target = $region52
        $region51: #{tpu_custom_call.1} parent=43 // pred_region
          %256 = dma.done [#allocation7], 2048
        $region52: #{tpu_custom_call.1} parent=43 // pred_fallthru
          _
        %p257 = pneg %p48
        %p258 = pneg %p45
        %p259 = pneg %p69
        %p260 = pneg %p66
        %p261 = pneg %p90
        %p262 = pneg %p87
        %p263 = pneg %p111
        %p264 = pneg %p108
        %p265 = pneg %p132
        %p266 = pneg %p129
        %p267 = pneg %p153
        %p268 = pneg %p150
        %p269 = pneg %p181
        %p270 = pneg %p178
        %s271 = smul.u32 2, %s25
        %p272 = scmp.lt.s32.totalorder %s24, 1
        %s273 = scalar_select %p272, %s24, 1
        %p274 = scmp.lt.s32.totalorder %s271, 1
        %s275 = scalar_select %p274, %s271, 1
        %s276 = smul.addr %s273, 2
        %s277 = sadd.s32 %s275, %s276
        %s278 = smul.addr %s277, 8
        %s279 = scalar_lea.vmem %s7, %s278
        %s280 = smul.u32 2, %s25
        %p281 = scmp.lt.s32.totalorder %s24, 1
        %s282 = scalar_select %p281, %s24, 1
        %p283 = scmp.lt.s32.totalorder %s280, 1
        %s284 = scalar_select %p283, %s280, 1
        %s285 = smul.addr %s282, 2
        %s286 = sadd.s32 %s284, %s285
        %s287 = smul.addr %s286, 8
        %s288 = scalar_lea.vmem %s7, %s287
        %s289 = smul.u32 2, %s25
        %s290 = smul.u32 %s25, 16
        %s291 = smul.u32 %s24, 24
        %s292 = sadd.s32 %s290, %s291
        %s293 = scalar_lea.hbm %s0, %s292
        // Predicated region
        $region53: #{tpu_custom_call.1} parent=43 // pred_check
          _
        $region54: #{tpu_custom_call.1} parent=43 // pred_check_branch
          %295 = sbr.rel target = $region56
        $region55: #{tpu_custom_call.1} parent=43 // pred_region
          %296 = sst [smem:[#allocation10]] [#allocation9]
          %297 = sst [smem:[#allocation11]] [#allocation8]
        $region56: #{tpu_custom_call.1} parent=43 // pred_fallthru
          _
        %299 = shalt.err (0)
        %s301 = sshll.u32 %s293, 4
        %s302 = int_to_ptr.hbm [resolvable:$true] %s301
        %s303 = sshll.u32 [#allocation2], 4
        %s304 = int_to_ptr.vmem [resolvable:$true] %s303
        %306 = dma.hbm_to_vmem [thread:$0]  %s302, 384, %s304, [#allocation3]
        %s307 = smul.u32 24, 1
        %s308 = sshll.u32 %s307, 4
        %309 = dma.done [#allocation3], %s308
        %v310 = vld [vmem:[#allocation2] sm:$0xff]
        %v311 = vld [vmem:[#allocation2 + $0x8] sm:$0xff]
        %v312 = vld [vmem:[#allocation2 + $0x10] sm:$0xff]
        %v313 = vrot.slane %v310, 1
        %v314 = vrot.slane %v311, 1
        %v315 = vrot.slane %v312, 1
        %v316 = vlaneseq
        %v317 = vshrl.u32 %v316, 7
        %vm318 = vcmp.lt.s32.totalorder %v317, 7
        %v319 = vsel %vm318, %v314, %v315
        %v320 = vsel %vm318, %v313, %v314
        %v321 = vsel %vm318, %v315, %v313
        %v322 = vrot.slane %v310, 2
        %v323 = vrot.slane %v311, 2
        %v324 = vrot.slane %v312, 2
        %vm325 = vcmp.lt.s32.totalorder %v317, 6
        %v326 = vsel %vm325, %v323, %v324
        %v327 = vsel %vm325, %v322, %v323
        %v328 = vsel %vm325, %v324, %v322
        %v329 = vrot.slane %v310, 3
        %v330 = vrot.slane %v311, 3
        %v331 = vrot.slane %v312, 3
        %vm332 = vcmp.lt.s32.totalorder %v317, 5
        %v333 = vsel %vm332, %v330, %v331
        %v334 = vsel %vm332, %v329, %v330
        %v335 = vsel %vm332, %v331, %v329
        %v336 = vrot.slane %v310, 4
        %v337 = vrot.slane %v311, 4
        %v338 = vrot.slane %v312, 4
        %vm339 = vcmp.lt.s32.totalorder %v317, 4
        %v340 = vsel %vm339, %v337, %v338
        %v341 = vsel %vm339, %v336, %v337
        %v342 = vsel %vm339, %v338, %v336
        %v343 = vrot.slane %v310, 5
        %v344 = vrot.slane %v311, 5
        %v345 = vrot.slane %v312, 5
        %vm346 = vcmp.lt.s32.totalorder %v317, 3
        %v347 = vsel %vm346, %v344, %v345
        %v348 = vsel %vm346, %v343, %v344
        %v349 = vsel %vm346, %v345, %v343
        %v350 = vrot.slane %v310, 6
        %v351 = vrot.slane %v311, 6
        %v352 = vrot.slane %v312, 6
        %vm353 = vcmp.lt.s32.totalorder %v317, 2
        %v354 = vsel %vm353, %v351, %v352
        %v355 = vsel %vm353, %v350, %v351
        %v356 = vsel %vm353, %v352, %v350
        %v357 = vrot.slane %v310, 7
        %v358 = vrot.slane %v311, 7
        %v359 = vrot.slane %v312, 7
        %vm360 = vcmp.lt.s32.totalorder %v317, 1
        %v361 = vsel %vm360, %v358, %v359
        %v362 = vsel %vm360, %v357, %v358
        %v363 = vsel %vm360, %v359, %v357
        %v364 = vld [vmem:[#allocation4] sm:$0xff]
        %v365 = vld [vmem:[#allocation4 + $0x8] sm:$0xff]
        %v366 = vld [vmem:[#allocation4 + $0x10] sm:$0xff]
        %v367 = vld [vmem:[#allocation4 + $0x18] sm:$0xff]
        %v368 = vld [vmem:[#allocation4 + $0x20] sm:$0xff]
        %v369 = vld [vmem:[#allocation4 + $0x28] sm:$0xff]
        %v370 = vld [vmem:[#allocation4 + $0x30] sm:$0xff]
        %v371 = vld [vmem:[#allocation4 + $0x38] sm:$0xff]
        %v372 = vld [vmem:[#allocation4 + $0x40] sm:$0xff]
        %v373 = vld [vmem:[#allocation4 + $0x48] sm:$0xff]
        %v374 = vld [vmem:[#allocation4 + $0x50] sm:$0xff]
        %v375 = vld [vmem:[#allocation4 + $0x58] sm:$0xff]
        %v376 = vld [vmem:[#allocation4 + $0x60] sm:$0xff]
        %v377 = vld [vmem:[#allocation4 + $0x68] sm:$0xff]
        %v378 = vld [vmem:[#allocation4 + $0x70] sm:$0xff]
        %v379 = vld [vmem:[#allocation4 + $0x78] sm:$0xff]
        %v380 = vld [vmem:[#allocation4 + $0x80] sm:$0xff]
        %v381 = vld [vmem:[#allocation4 + $0x88] sm:$0xff]
        %v382 = vld [vmem:[#allocation4 + $0x90] sm:$0xff]
        %v383 = vld [vmem:[#allocation4 + $0x98] sm:$0xff]
        %v384 = vld [vmem:[#allocation4 + $0xa0] sm:$0xff]
        %v385 = vld [vmem:[#allocation4 + $0xa8] sm:$0xff]
        %v386 = vld [vmem:[#allocation4 + $0xb0] sm:$0xff]
        %v387 = vld [vmem:[#allocation4 + $0xb8] sm:$0xff]
        %v388 = vld [vmem:[#allocation4 + $0xc0] sm:$0xff]
        %v389 = vld [vmem:[#allocation4 + $0xc8] sm:$0xff]
        %v390 = vld [vmem:[#allocation4 + $0xd0] sm:$0xff]
        %v391 = vld [vmem:[#allocation4 + $0xd8] sm:$0xff]
        %v392 = vld [vmem:[#allocation4 + $0xe0] sm:$0xff]
        %v393 = vld [vmem:[#allocation4 + $0xe8] sm:$0xff]
        %v394 = vld [vmem:[#allocation4 + $0xf0] sm:$0xff]
        %v395 = vld [vmem:[#allocation4 + $0xf8] sm:$0xff]
        %v396 = vld [vmem:[#allocation4 + $0x100] sm:$0xff]
        %v397 = vld [vmem:[#allocation4 + $0x108] sm:$0xff]
        %v398 = vld [vmem:[#allocation4 + $0x110] sm:$0xff]
        %v399 = vld [vmem:[#allocation4 + $0x118] sm:$0xff]
        %v400 = vld [vmem:[#allocation4 + $0x120] sm:$0xff]
        %v401 = vld [vmem:[#allocation4 + $0x128] sm:$0xff]
        %v402 = vld [vmem:[#allocation4 + $0x130] sm:$0xff]
        %v403 = vld [vmem:[#allocation4 + $0x138] sm:$0xff]
        %v404 = vld [vmem:[#allocation4 + $0x140] sm:$0xff]
        %v405 = vld [vmem:[#allocation4 + $0x148] sm:$0xff]
        %v406 = vld [vmem:[#allocation4 + $0x150] sm:$0xff]
        %v407 = vld [vmem:[#allocation4 + $0x158] sm:$0xff]
        %v408 = vld [vmem:[#allocation4 + $0x160] sm:$0xff]
        %v409 = vld [vmem:[#allocation4 + $0x168] sm:$0xff]
        %v410 = vld [vmem:[#allocation4 + $0x170] sm:$0xff]
        %v411 = vld [vmem:[#allocation4 + $0x178] sm:$0xff]
        %v412 = vld [vmem:[#allocation4 + $0x180] sm:$0xff]
        %v413 = vld [vmem:[#allocation4 + $0x188] sm:$0xff]
        %v414 = vld [vmem:[#allocation4 + $0x190] sm:$0xff]
        %v415 = vld [vmem:[#allocation4 + $0x198] sm:$0xff]
        %v416 = vld [vmem:[#allocation4 + $0x1a0] sm:$0xff]
        %v417 = vld [vmem:[#allocation4 + $0x1a8] sm:$0xff]
        %v418 = vld [vmem:[#allocation4 + $0x1b0] sm:$0xff]
        %v419 = vld [vmem:[#allocation4 + $0x1b8] sm:$0xff]
        %v420 = vld [vmem:[#allocation4 + $0x1c0] sm:$0xff]
        %v421 = vld [vmem:[#allocation4 + $0x1c8] sm:$0xff]
        %v422 = vld [vmem:[#allocation4 + $0x1d0] sm:$0xff]
        %v423 = vld [vmem:[#allocation4 + $0x1d8] sm:$0xff]
        %v424 = vld [vmem:[#allocation4 + $0x1e0] sm:$0xff]
        %v425 = vld [vmem:[#allocation4 + $0x1e8] sm:$0xff]
        %v426 = vld [vmem:[#allocation4 + $0x1f0] sm:$0xff]
        %v427 = vld [vmem:[#allocation4 + $0x1f8] sm:$0xff]
        %v428 = vld [vmem:[#allocation4 + $0x200] sm:$0xff]
        %v429 = vld [vmem:[#allocation4 + $0x208] sm:$0xff]
        %v430 = vld [vmem:[#allocation4 + $0x210] sm:$0xff]
        %v431 = vld [vmem:[#allocation4 + $0x218] sm:$0xff]
        %v432 = vld [vmem:[#allocation4 + $0x220] sm:$0xff]
        %v433 = vld [vmem:[#allocation4 + $0x228] sm:$0xff]
        %v434 = vld [vmem:[#allocation4 + $0x230] sm:$0xff]
        %v435 = vld [vmem:[#allocation4 + $0x238] sm:$0xff]
        %v436 = vld [vmem:[#allocation4 + $0x240] sm:$0xff]
        %v437 = vld [vmem:[#allocation4 + $0x248] sm:$0xff]
        %v438 = vld [vmem:[#allocation4 + $0x250] sm:$0xff]
        %v439 = vld [vmem:[#allocation4 + $0x258] sm:$0xff]
        %v440 = vld [vmem:[#allocation4 + $0x260] sm:$0xff]
        %v441 = vld [vmem:[#allocation4 + $0x268] sm:$0xff]
        %v442 = vld [vmem:[#allocation4 + $0x270] sm:$0xff]
        %v443 = vld [vmem:[#allocation4 + $0x278] sm:$0xff]
        %v444 = vld [vmem:[#allocation4 + $0x280] sm:$0xff]
        %v445 = vld [vmem:[#allocation4 + $0x288] sm:$0xff]
        %v446 = vld [vmem:[#allocation4 + $0x290] sm:$0xff]
        %v447 = vld [vmem:[#allocation4 + $0x298] sm:$0xff]
        %v448 = vld [vmem:[#allocation4 + $0x2a0] sm:$0xff]
        %v449 = vld [vmem:[#allocation4 + $0x2a8] sm:$0xff]
        %v450 = vld [vmem:[#allocation4 + $0x2b0] sm:$0xff]
        %v451 = vld [vmem:[#allocation4 + $0x2b8] sm:$0xff]
        %v452 = vld [vmem:[#allocation4 + $0x2c0] sm:$0xff]
        %v453 = vld [vmem:[#allocation4 + $0x2c8] sm:$0xff]
        %v454 = vld [vmem:[#allocation4 + $0x2d0] sm:$0xff]
        %v455 = vld [vmem:[#allocation4 + $0x2d8] sm:$0xff]
        %v456 = vld [vmem:[#allocation4 + $0x2e0] sm:$0xff]
        %v457 = vld [vmem:[#allocation4 + $0x2e8] sm:$0xff]
        %v458 = vld [vmem:[#allocation4 + $0x2f0] sm:$0xff]
        %v459 = vld [vmem:[#allocation4 + $0x2f8] sm:$0xff]
        %v460 = vld [vmem:[#allocation4 + $0x300] sm:$0xff]
        %v461 = vld [vmem:[#allocation4 + $0x308] sm:$0xff]
        %v462 = vld [vmem:[#allocation4 + $0x310] sm:$0xff]
        %v463 = vld [vmem:[#allocation4 + $0x318] sm:$0xff]
        %v464 = vld [vmem:[#allocation4 + $0x320] sm:$0xff]
        %v465 = vld [vmem:[#allocation4 + $0x328] sm:$0xff]
        %v466 = vld [vmem:[#allocation4 + $0x330] sm:$0xff]
        %v467 = vld [vmem:[#allocation4 + $0x338] sm:$0xff]
        %v468 = vld [vmem:[#allocation4 + $0x340] sm:$0xff]
        %v469 = vld [vmem:[#allocation4 + $0x348] sm:$0xff]
        %v470 = vld [vmem:[#allocation4 + $0x350] sm:$0xff]
        %v471 = vld [vmem:[#allocation4 + $0x358] sm:$0xff]
        %v472 = vld [vmem:[#allocation4 + $0x360] sm:$0xff]
        %v473 = vld [vmem:[#allocation4 + $0x368] sm:$0xff]
        %v474 = vld [vmem:[#allocation4 + $0x370] sm:$0xff]
        %v475 = vld [vmem:[#allocation4 + $0x378] sm:$0xff]
        %v476 = vld [vmem:[#allocation4 + $0x380] sm:$0xff]
        %v477 = vld [vmem:[#allocation4 + $0x388] sm:$0xff]
        %v478 = vld [vmem:[#allocation4 + $0x390] sm:$0xff]
        %v479 = vld [vmem:[#allocation4 + $0x398] sm:$0xff]
        %v480 = vld [vmem:[#allocation4 + $0x3a0] sm:$0xff]
        %v481 = vld [vmem:[#allocation4 + $0x3a8] sm:$0xff]
        %v482 = vld [vmem:[#allocation4 + $0x3b0] sm:$0xff]
        %v483 = vld [vmem:[#allocation4 + $0x3b8] sm:$0xff]
        %v484 = vld [vmem:[#allocation4 + $0x3c0] sm:$0xff]
        %v485 = vld [vmem:[#allocation4 + $0x3c8] sm:$0xff]
        %v486 = vld [vmem:[#allocation4 + $0x3d0] sm:$0xff]
        %v487 = vld [vmem:[#allocation4 + $0x3d8] sm:$0xff]
        %v488 = vld [vmem:[#allocation4 + $0x3e0] sm:$0xff]
        %v489 = vld [vmem:[#allocation4 + $0x3e8] sm:$0xff]
        %v490 = vld [vmem:[#allocation4 + $0x3f0] sm:$0xff]
        %v491 = vld [vmem:[#allocation4 + $0x3f8] sm:$0xff]
        %v492 = vld [vmem:[#allocation4 + $0x400] sm:$0xff]
        %v493 = vld [vmem:[#allocation4 + $0x408] sm:$0xff]
        %v494 = vld [vmem:[#allocation4 + $0x410] sm:$0xff]
        %v495 = vld [vmem:[#allocation4 + $0x418] sm:$0xff]
        %v496 = vld [vmem:[#allocation4 + $0x420] sm:$0xff]
        %v497 = vld [vmem:[#allocation4 + $0x428] sm:$0xff]
        %v498 = vld [vmem:[#allocation4 + $0x430] sm:$0xff]
        %v499 = vld [vmem:[#allocation4 + $0x438] sm:$0xff]
        %v500 = vld [vmem:[#allocation4 + $0x440] sm:$0xff]
        %v501 = vld [vmem:[#allocation4 + $0x448] sm:$0xff]
        %v502 = vld [vmem:[#allocation4 + $0x450] sm:$0xff]
        %v503 = vld [vmem:[#allocation4 + $0x458] sm:$0xff]
        %v504 = vld [vmem:[#allocation4 + $0x460] sm:$0xff]
        %v505 = vld [vmem:[#allocation4 + $0x468] sm:$0xff]
        %v506 = vld [vmem:[#allocation4 + $0x470] sm:$0xff]
        %v507 = vld [vmem:[#allocation4 + $0x478] sm:$0xff]
        %v508 = vld [vmem:[%s2] sm:$0x1]
        %v510 = vperm.slane %v508, 0
        %512 = vmatpush.msra.mxu0 %v379
        %513 = vmatpush.msra.mxu0 %v378
        %514 = vmatpush.msra.mxu0 %v377
        %515 = vmatpush.msra.mxu0 %v376
        %516 = vmatpush.msra.mxu0 %v375
        %517 = vmatpush.msra.mxu0 %v374
        %518 = vmatpush.msra.mxu0 %v373
        %519 = vmatpush.msra.mxu0 %v372
        %520 = vmatpush.msra.mxu0 %v371
        %521 = vmatpush.msra.mxu0 %v370
        %522 = vmatpush.msra.mxu0 %v369
        %523 = vmatpush.msra.mxu0 %v368
        %524 = vmatpush.msra.mxu0 %v367
        %525 = vmatpush.msra.mxu0 %v366
        %526 = vmatpush.msra.mxu0 %v365
        %527 = vmatpush.msra.mxu0 %v364
        %528 = vmatmul.f32.gmra.mxu0 %v310
        %v529 = vpop.f32.mrf.mxu0
        %v530 = vadd.f32 %v510, %v529
        %531 = vmatmul.f32.gmra.mxu0 %v311
        %v532 = vpop.f32.mrf.mxu0
        %v533 = vadd.f32 %v510, %v532
        %534 = vmatmul.f32.gmra.mxu0 %v312
        %v535 = vpop.f32.mrf.mxu0
        %v536 = vadd.f32 %v510, %v535
        %537 = vdwg.mxu0
        %538 = vmatpush.msra.mxu0 %v395
        %539 = vmatpush.msra.mxu0 %v394
        %540 = vmatpush.msra.mxu0 %v393
        %541 = vmatpush.msra.mxu0 %v392
        %542 = vmatpush.msra.mxu0 %v391
        %543 = vmatpush.msra.mxu0 %v390
        %544 = vmatpush.msra.mxu0 %v389
        %545 = vmatpush.msra.mxu0 %v388
        %546 = vmatpush.msra.mxu0 %v387
        %547 = vmatpush.msra.mxu0 %v386
        %548 = vmatpush.msra.mxu0 %v385
        %549 = vmatpush.msra.mxu0 %v384
        %550 = vmatpush.msra.mxu0 %v383
        %551 = vmatpush.msra.mxu0 %v382
        %552 = vmatpush.msra.mxu0 %v381
        %553 = vmatpush.msra.mxu0 %v380
        %554 = vmatmul.f32.gmra.mxu0 %v320
        %v555 = vpop.f32.mrf.mxu0
        %v556 = vadd.f32 %v530, %v555
        %557 = vmatmul.f32.gmra.mxu0 %v319
        %v558 = vpop.f32.mrf.mxu0
        %v559 = vadd.f32 %v533, %v558
        %560 = vmatmul.f32.gmra.mxu0 %v321
        %v561 = vpop.f32.mrf.mxu0
        %v562 = vadd.f32 %v536, %v561
        %563 = vdwg.mxu0
        %564 = vmatpush.msra.mxu0 %v411
        %565 = vmatpush.msra.mxu0 %v410
        %566 = vmatpush.msra.mxu0 %v409
        %567 = vmatpush.msra.mxu0 %v408
        %568 = vmatpush.msra.mxu0 %v407
        %569 = vmatpush.msra.mxu0 %v406
        %570 = vmatpush.msra.mxu0 %v405
        %571 = vmatpush.msra.mxu0 %v404
        %572 = vmatpush.msra.mxu0 %v403
        %573 = vmatpush.msra.mxu0 %v402
        %574 = vmatpush.msra.mxu0 %v401
        %575 = vmatpush.msra.mxu0 %v400
        %576 = vmatpush.msra.mxu0 %v399
        %577 = vmatpush.msra.mxu0 %v398
        %578 = vmatpush.msra.mxu0 %v397
        %579 = vmatpush.msra.mxu0 %v396
        %580 = vmatmul.f32.gmra.mxu0 %v327
        %v581 = vpop.f32.mrf.mxu0
        %v582 = vadd.f32 %v556, %v581
        %583 = vmatmul.f32.gmra.mxu0 %v326
        %v584 = vpop.f32.mrf.mxu0
        %v585 = vadd.f32 %v559, %v584
        %586 = vmatmul.f32.gmra.mxu0 %v328
        %v587 = vpop.f32.mrf.mxu0
        %v588 = vadd.f32 %v562, %v587
        %589 = vdwg.mxu0
        %590 = vmatpush.msra.mxu0 %v427
        %591 = vmatpush.msra.mxu0 %v426
        %592 = vmatpush.msra.mxu0 %v425
        %593 = vmatpush.msra.mxu0 %v424
        %594 = vmatpush.msra.mxu0 %v423
        %595 = vmatpush.msra.mxu0 %v422
        %596 = vmatpush.msra.mxu0 %v421
        %597 = vmatpush.msra.mxu0 %v420
        %598 = vmatpush.msra.mxu0 %v419
        %599 = vmatpush.msra.mxu0 %v418
        %600 = vmatpush.msra.mxu0 %v417
        %601 = vmatpush.msra.mxu0 %v416
        %602 = vmatpush.msra.mxu0 %v415
        %603 = vmatpush.msra.mxu0 %v414
        %604 = vmatpush.msra.mxu0 %v413
        %605 = vmatpush.msra.mxu0 %v412
        %606 = vmatmul.f32.gmra.mxu0 %v334
        %v607 = vpop.f32.mrf.mxu0
        %v608 = vadd.f32 %v582, %v607
        %609 = vmatmul.f32.gmra.mxu0 %v333
        %v610 = vpop.f32.mrf.mxu0
        %v611 = vadd.f32 %v585, %v610
        %612 = vmatmul.f32.gmra.mxu0 %v335
        %v613 = vpop.f32.mrf.mxu0
        %v614 = vadd.f32 %v588, %v613
        %615 = vdwg.mxu0
        %616 = vmatpush.msra.mxu0 %v443
        %617 = vmatpush.msra.mxu0 %v442
        %618 = vmatpush.msra.mxu0 %v441
        %619 = vmatpush.msra.mxu0 %v440
        %620 = vmatpush.msra.mxu0 %v439
        %621 = vmatpush.msra.mxu0 %v438
        %622 = vmatpush.msra.mxu0 %v437
        %623 = vmatpush.msra.mxu0 %v436
        %624 = vmatpush.msra.mxu0 %v435
        %625 = vmatpush.msra.mxu0 %v434
        %626 = vmatpush.msra.mxu0 %v433
        %627 = vmatpush.msra.mxu0 %v432
        %628 = vmatpush.msra.mxu0 %v431
        %629 = vmatpush.msra.mxu0 %v430
        %630 = vmatpush.msra.mxu0 %v429
        %631 = vmatpush.msra.mxu0 %v428
        %632 = vmatmul.f32.gmra.mxu0 %v341
        %v633 = vpop.f32.mrf.mxu0
        %v634 = vadd.f32 %v608, %v633
        %635 = vmatmul.f32.gmra.mxu0 %v340
        %v636 = vpop.f32.mrf.mxu0
        %v637 = vadd.f32 %v611, %v636
        %638 = vmatmul.f32.gmra.mxu0 %v342
        %v639 = vpop.f32.mrf.mxu0
        %v640 = vadd.f32 %v614, %v639
        %641 = vdwg.mxu0
        %642 = vmatpush.msra.mxu0 %v459
        %643 = vmatpush.msra.mxu0 %v458
        %644 = vmatpush.msra.mxu0 %v457
        %645 = vmatpush.msra.mxu0 %v456
        %646 = vmatpush.msra.mxu0 %v455
        %647 = vmatpush.msra.mxu0 %v454
        %648 = vmatpush.msra.mxu0 %v453
        %649 = vmatpush.msra.mxu0 %v452
        %650 = vmatpush.msra.mxu0 %v451
        %651 = vmatpush.msra.mxu0 %v450
        %652 = vmatpush.msra.mxu0 %v449
        %653 = vmatpush.msra.mxu0 %v448
        %654 = vmatpush.msra.mxu0 %v447
        %655 = vmatpush.msra.mxu0 %v446
        %656 = vmatpush.msra.mxu0 %v445
        %657 = vmatpush.msra.mxu0 %v444
        %658 = vmatmul.f32.gmra.mxu0 %v348
        %v659 = vpop.f32.mrf.mxu0
        %v660 = vadd.f32 %v634, %v659
        %661 = vmatmul.f32.gmra.mxu0 %v347
        %v662 = vpop.f32.mrf.mxu0
        %v663 = vadd.f32 %v637, %v662
        %664 = vmatmul.f32.gmra.mxu0 %v349
        %v665 = vpop.f32.mrf.mxu0
        %v666 = vadd.f32 %v640, %v665
        %667 = vdwg.mxu0
        %668 = vmatpush.msra.mxu0 %v475
        %669 = vmatpush.msra.mxu0 %v474
        %670 = vmatpush.msra.mxu0 %v473
        %671 = vmatpush.msra.mxu0 %v472
        %672 = vmatpush.msra.mxu0 %v471
        %673 = vmatpush.msra.mxu0 %v470
        %674 = vmatpush.msra.mxu0 %v469
        %675 = vmatpush.msra.mxu0 %v468
        %676 = vmatpush.msra.mxu0 %v467
        %677 = vmatpush.msra.mxu0 %v466
        %678 = vmatpush.msra.mxu0 %v465
        %679 = vmatpush.msra.mxu0 %v464
        %680 = vmatpush.msra.mxu0 %v463
        %681 = vmatpush.msra.mxu0 %v462
        %682 = vmatpush.msra.mxu0 %v461
        %683 = vmatpush.msra.mxu0 %v460
        %684 = vmatmul.f32.gmra.mxu0 %v355
        %v685 = vpop.f32.mrf.mxu0
        %v686 = vadd.f32 %v660, %v685
        %687 = vmatmul.f32.gmra.mxu0 %v354
        %v688 = vpop.f32.mrf.mxu0
        %v689 = vadd.f32 %v663, %v688
        %690 = vmatmul.f32.gmra.mxu0 %v356
        %v691 = vpop.f32.mrf.mxu0
        %v692 = vadd.f32 %v666, %v691
        %693 = vdwg.mxu0
        %694 = vmatpush.msra.mxu0 %v491
        %695 = vmatpush.msra.mxu0 %v490
        %696 = vmatpush.msra.mxu0 %v489
        %697 = vmatpush.msra.mxu0 %v488
        %698 = vmatpush.msra.mxu0 %v487
        %699 = vmatpush.msra.mxu0 %v486
        %700 = vmatpush.msra.mxu0 %v485
        %701 = vmatpush.msra.mxu0 %v484
        %702 = vmatpush.msra.mxu0 %v483
        %703 = vmatpush.msra.mxu0 %v482
        %704 = vmatpush.msra.mxu0 %v481
        %705 = vmatpush.msra.mxu0 %v480
        %706 = vmatpush.msra.mxu0 %v479
        %707 = vmatpush.msra.mxu0 %v478
        %708 = vmatpush.msra.mxu0 %v477
        %709 = vmatpush.msra.mxu0 %v476
        %710 = vmatmul.f32.gmra.mxu0 %v362
        %v711 = vpop.f32.mrf.mxu0
        %v712 = vadd.f32 %v686, %v711
        %713 = vmatmul.f32.gmra.mxu0 %v361
        %v714 = vpop.f32.mrf.mxu0
        %v715 = vadd.f32 %v689, %v714
        %716 = vmatmul.f32.gmra.mxu0 %v363
        %v717 = vpop.f32.mrf.mxu0
        %v718 = vadd.f32 %v692, %v717
        %719 = vdwg.mxu0
        %720 = vmatpush.msra.mxu0 %v507
        %721 = vmatpush.msra.mxu0 %v506
        %722 = vmatpush.msra.mxu0 %v505
        %723 = vmatpush.msra.mxu0 %v504
        %724 = vmatpush.msra.mxu0 %v503
        %725 = vmatpush.msra.mxu0 %v502
        %726 = vmatpush.msra.mxu0 %v501
        %727 = vmatpush.msra.mxu0 %v500
        %728 = vmatpush.msra.mxu0 %v499
        %729 = vmatpush.msra.mxu0 %v498
        %730 = vmatpush.msra.mxu0 %v497
        %731 = vmatpush.msra.mxu0 %v496
        %732 = vmatpush.msra.mxu0 %v495
        %733 = vmatpush.msra.mxu0 %v494
        %734 = vmatpush.msra.mxu0 %v493
        %735 = vmatpush.msra.mxu0 %v492
        %736 = vmatmul.f32.gmra.mxu0 %v311
        %v737 = vpop.f32.mrf.mxu0
        %v738 = vadd.f32 %v712, %v737
        %739 = vmatmul.f32.gmra.mxu0 %v312
        %v740 = vpop.f32.mrf.mxu0
        %v741 = vadd.f32 %v715, %v740
        %742 = vmatmul.f32.gmra.mxu0 %v310
        %v743 = vpop.f32.mrf.mxu0
        %v744 = vadd.f32 %v718, %v743
        %745 = vdwg.mxu0
        %v746 = vmax.f32 %v738, 0.0
        %v747 = vmax.f32 %v741, 0.0
        %v748 = vmax.f32 %v744, 0.0
        %v749 = vld [vmem:[#allocation6] sm:$0xff]
        %v750 = vld [vmem:[#allocation6 + $0x8] sm:$0xff]
        %v751 = vld [vmem:[#allocation6 + $0x10] sm:$0xff]
        %v752 = vld [vmem:[#allocation6 + $0x18] sm:$0xff]
        %v753 = vld [vmem:[#allocation6 + $0x20] sm:$0xff]
        %v754 = vld [vmem:[#allocation6 + $0x28] sm:$0xff]
        %v755 = vld [vmem:[#allocation6 + $0x30] sm:$0xff]
        %v756 = vld [vmem:[#allocation6 + $0x38] sm:$0xff]
        %v757 = vld [vmem:[#allocation6 + $0x40] sm:$0xff]
        %v758 = vld [vmem:[#allocation6 + $0x48] sm:$0xff]
        %v759 = vld [vmem:[#allocation6 + $0x50] sm:$0xff]
        %v760 = vld [vmem:[#allocation6 + $0x58] sm:$0xff]
        %v761 = vld [vmem:[#allocation6 + $0x60] sm:$0xff]
        %v762 = vld [vmem:[#allocation6 + $0x68] sm:$0xff]
        %v763 = vld [vmem:[#allocation6 + $0x70] sm:$0xff]
        %v764 = vld [vmem:[#allocation6 + $0x78] sm:$0xff]
        %765 = vmatpush.msra.mxu0 %v764
        %766 = vmatpush.msra.mxu0 %v763
        %767 = vmatpush.msra.mxu0 %v762
        %768 = vmatpush.msra.mxu0 %v761
        %769 = vmatpush.msra.mxu0 %v760
        %770 = vmatpush.msra.mxu0 %v759
        %771 = vmatpush.msra.mxu0 %v758
        %772 = vmatpush.msra.mxu0 %v757
        %773 = vmatpush.msra.mxu0 %v756
        %774 = vmatpush.msra.mxu0 %v755
        %775 = vmatpush.msra.mxu0 %v754
        %776 = vmatpush.msra.mxu0 %v753
        %777 = vmatpush.msra.mxu0 %v752
        %778 = vmatpush.msra.mxu0 %v751
        %779 = vmatpush.msra.mxu0 %v750
        %780 = vmatpush.msra.mxu0 %v749
        %781 = vmatmul.f32.gmra.mxu0 %v746
        %v782 = vpop.f32.mrf.mxu0
        %v783 = vadd.f32 0.0, %v782
        %784 = vmatmul.f32.gmra.mxu0 %v747
        %v785 = vpop.f32.mrf.mxu0
        %v786 = vadd.f32 0.0, %v785
        %787 = vmatmul.f32.gmra.mxu0 %v748
        %v788 = vpop.f32.mrf.mxu0
        %789 = vdwg.mxu0
        %v790 = vld [vmem:[%s4] sm:$0x1]
        %v792 = vperm.slane %v790, 0
        %v794 = vadd.f32 %v783, %v792
        %v795 = vadd.f32 %v786, %v792
        %v796 = vadd.f32 %v794, %v341
        %v797 = vadd.f32 %v795, %v340
        %v798 = vlaneseq
        %v799 = vand.u32 %v798, 127
        %vm800 = vcmp.lt.s32.totalorder %v799, 8
        %v801 = vsel %vm800, %v796, 0.0
        %v802 = vsel %vm800, %v797, 0.0
        %803 = vadd.xlane.f32.xlu0 %v801
        %v804 = vpop.xlane.xlu0 %803
        %805 = vadd.xlane.f32.xlu0 %v802
        %v806 = vpop.xlane.xlu0 %805
        %v807 = vmul.f32 %v804, 0.125
        %v808 = vmul.f32 %v806, 0.125
        %v809 = vsub.f32 %v796, %v807
        %v810 = vsub.f32 %v797, %v808
        %v811 = vsel %vm800, %v809, 0.0
        %v812 = vsel %vm800, %v810, 0.0
        %v813 = vmul.f32 %v811, %v811
        %v814 = vmul.f32 %v812, %v812
        %815 = vadd.xlane.f32.xlu0 %v813
        %v816 = vpop.xlane.xlu0 %815
        %817 = vadd.xlane.f32.xlu0 %v814
        %v818 = vpop.xlane.xlu0 %817
        %v819 = vmul.f32 %v816, 0.125
        %v820 = vmul.f32 %v818, 0.125
        %v821 = vadd.f32 %v819, 1e-05
        %v822 = vadd.f32 %v820, 1e-05
        %v823 = vrsqrt.pop %v821
        %v824 = vmul.f32 %v823, %v821
        %v825 = vmul.f32 %v824, %v823
        %v826 = vmul.f32 0.5, %v825
        %v827 = vsub.f32 1.5, %v826
        %v828 = vmul.f32 %v823, %v827
        %vm829 = vweird.f32 %v821
        %vm830 = vweird.f32 %v823
        %vm831 = vmor %vm829, %vm830
        %v832 = vsel %vm831, %v823, %v828
        %v833 = vrsqrt.pop %v822
        %v834 = vmul.f32 %v833, %v822
        %v835 = vmul.f32 %v834, %v833
        %v836 = vmul.f32 0.5, %v835
        %v837 = vsub.f32 1.5, %v836
        %v838 = vmul.f32 %v833, %v837
        %vm839 = vweird.f32 %v822
        %vm840 = vweird.f32 %v833
        %vm841 = vmor %vm839, %vm840
        %v842 = vsel %vm841, %v833, %v838
        %v843 = vmul.f32 %v809, %v832
        %v844 = vmul.f32 %v810, %v842
        %v845 = vld [vmem:[%s5] sm:$0x1]
        %v847 = vperm.slane %v845, 0
        %v849 = vmul.f32 %v843, %v847
        %v850 = vmul.f32 %v844, %v847
        %v851 = vld [vmem:[%s6] sm:$0x1]
        %v853 = vperm.slane %v851, 0
        %v855 = vadd.f32 %v849, %v853
        %v856 = vadd.f32 %v850, %v853
        %vm857 = vcmask 64512
        %858 = vst.msk [vmem:[%s288] sm:$0xff] %vm857, %v855
        %859 = vst.msk [vmem:[%s288 + $0x8] sm:$0xff] %vm857, %v856
        %s860 = smul.u32 2, %s25
        %p861 = scmp.lt.s32.totalorder %s24, 1
        %s862 = scalar_select %p861, %s24, 1
        %p863 = scmp.lt.s32.totalorder %s860, 1
        %s864 = scalar_select %p863, %s860, 1
        %s865 = smul.addr %s862, 2
        %s866 = sadd.s32 %s864, %s865
        %s867 = smul.addr %s866, 8
        %s868 = scalar_lea.vmem %s7, %s867
        // Predicated region
        $region57: #{tpu_custom_call.1} parent=43 // pred_check
          %p869 = pneg %p178
        $region58: #{tpu_custom_call.1} parent=43 // pred_check_branch
          %871 = sbr.rel (%p869) target = $region60
        $region59: #{tpu_custom_call.1} parent=43 // pred_region
          %s872 = smul.u32 2, %s25
        $region60: #{tpu_custom_call.1} parent=43 // pred_fallthru
          _
      $region44: #{tpu_custom_call.1} parent=5 // pred_fallthru
        _
      %p873 = scmp.le.s32.totalorder 2, %s15
      // Predicated region
      $region61: #{tpu_custom_call.1} parent=5 // pred_check
        %p874 = pneg %p873
      $region62: #{tpu_custom_call.1} parent=5 // pred_check_branch
        %876 = sbr.rel (%p874) target = $region64
      $region63: #{tpu_custom_call.1} parent=5 // pred_region
        %s877 = ssub.s32 %s15, 2
        // Predicated region
        $region65: #{tpu_custom_call.1} parent=63 // pred_check
          %p878 = pneg %p184
        $region66: #{tpu_custom_call.1} parent=63 // pred_check_branch
          %880 = sbr.rel (%p878) target = $region68
        $region67: #{tpu_custom_call.1} parent=63 // pred_region
          %s881 = smul.u32 2, %s27
          %p882 = scmp.lt.s32.totalorder %s26, 1
          %s883 = scalar_select %p882, %s26, 1
          %p884 = scmp.lt.s32.totalorder %s881, 1
          %s885 = scalar_select %p884, %s881, 1
          %s886 = smul.addr %s883, 2
          %s887 = sadd.s32 %s885, %s886
          %s888 = smul.addr %s887, 8
          %s889 = scalar_lea.vmem %s7, %s888
        $region68: #{tpu_custom_call.1} parent=63 // pred_fallthru
          _
      $region64: #{tpu_custom_call.1} parent=5 // pred_fallthru
        _
    $region6: #{tpu_custom_call.1} parent=1 // loop_footer
      %s19 = sadd.s32 1, %s15
    $region7: #{tpu_custom_call.1} parent=1 // loop_footer_branch
      %14 = sbr.rel target = $region3
    $region8: #{tpu_custom_call.1} parent=1 // loop_exit
      _
    %890 = vsyncpa [#allocation5], 1
    %s891 = scalar_lea.sflag [#allocation5], 1
    %892 = vsyncpa %s891, 1
    %893 = vsyncpa [#allocation7], 1
  %894 = vsyncmov [#allocation3]
  %s895 = vpop.sfrf %894
  %p896 = scmp.eq.s32.totalorder %s895, 0
  %p897 = pneg %p896
  %899 = shalt.err (%p897)

// kernel: tpu_custom_call.1
$region0: #{tpu_custom_call.1}
  #allocation0 [shape = 'u32[]', space=smem, size = 0x4, offset = 0x4, fixed_abs, tag = 'smem constant byte address 0x4 - core index']
  #allocation1 [shape = 'u32[72,128]{1,0:T(1,128)}', space=vmem, size = 0x9000, scoped, tag = 'internal scratch']
  #allocation2 [shape = 'f32[24,128]{1,0:T(8,128)}', space=vmem, size = 0x3000, scoped, tag = 'scratch operand']
  #allocation3 [shape = 's32[1]{0}', space=sflag, size = 0x4, scoped, tag = 'scratch operand']
  #allocation8 [shape = 's32[]', space=sflag, size = 0x4, offset = 0, fixed_abs, tag = 'sflag constant byte address 0x0 - dummy sync flag']
  #allocation9 [shape = 's32[]', space=sflag, size = 0x4, offset = 0, fixed_abs, tag = 'sflag constant byte address 0x0 - dummy sync flag']
  #allocation10 [shape = 'u32[]', space=smem, size = 0x4, offset = 0x44, fixed_abs, tag = 'smem constant byte address 0x44 - assertion arg 0']
  #allocation11 [shape = 'u32[]', space=smem, size = 0x4, offset = 0x48, fixed_abs, tag = 'smem constant byte address 0x48 - assertion arg 1']
  %s0 = inlined_call_operand.hbm [shape: f32[2,24,128], index: 0, kind: input, shape index: {}]
  %s1 = inlined_call_operand.hbm [shape: f32[1152,128], index: 1, kind: input, shape index: {}]
  %s2 = inlined_call_operand.vmem [shape: f32[1,128], index: 2, kind: input, shape index: {}]
  %s3 = inlined_call_operand.hbm [shape: f32[128,128], index: 3, kind: input, shape index: {}]
  %s4 = inlined_call_operand.vmem [shape: f32[1,128], index: 4, kind: input, shape index: {}]
  %s5 = inlined_call_operand.vmem [shape: f32[1,128], index: 5, kind: input, shape index: {}]
  %s6 = inlined_call_operand.vmem [shape: f32[1,128], index: 6, kind: input, shape index: {}]
  %s7 = inlined_call_operand.vmem [shape: f32[2,16,8], index: 7, kind: output, shape index: {}]
  %s8 = sld [smem:[#allocation0]]
  $region69: #{tpu_custom_call.1} parent=0
    _
  %s10 = ssub.s32 1, %s8
  %s11 = scalar_select 0, %s10, %s8
  $region1: #{tpu_custom_call.1} parent=0
    #allocation4 [shape = 'u8[589824]{0}', space=vmem, size = 0x90000, scoped, tag = 'input window, operand 1, single buffered']
    #allocation5 [shape = 's32[2]{0}', space=sflag, size = 0x8, scoped, tag = 'scoped memory for tpu_custom_call.1']
    #allocation6 [shape = 'u8[65536]{0}', space=vmem, size = 0x10000, scoped, tag = 'input window, operand 3, single buffered']
    #allocation7 [shape = 's32[1]{0}', space=sflag, size = 0x4, scoped, tag = 'scoped memory for tpu_custom_call.1']
    %12 = vsyncpa [#allocation5], 0
    %13 = vsyncpa [#allocation7], 0
    loop: start=0, step=1, limit=4
    $region2: #{tpu_custom_call.1} parent=1 // loop_pre_header
      _
    $region3: #{tpu_custom_call.1} parent=1 // loop_header
      %s15 = sphi 0, %s19
      %p16 = scmp.ge.s32.totalorder %s15, 4
      %s22 = sphi 0, %s34
      %s23 = sphi 0, %s30
      %s24 = sphi 0, %s22
      %s25 = sphi 0, %s23
      %s26 = sphi 0, %s24
      %s27 = sphi 0, %s25
      %s35 = sphi 0, %s35
      %s37 = sphi 0, %s35
      %s38 = sphi 0, %s37
      %s52 = sphi 0, %s38
      %s56 = sphi 0, %s56
      %s58 = sphi 0, %s56
      %s59 = sphi 0, %s58
      %s73 = sphi 0, %s59
      %s77 = sphi 0, %s77
      %s79 = sphi 0, %s77
      %s80 = sphi 0, %s79
      %s94 = sphi 0, %s80
      %s98 = sphi 0, %s98
      %s100 = sphi 0, %s98
      %s101 = sphi 0, %s100
      %s115 = sphi 0, %s101
      %s119 = sphi 0, %s119
      %s121 = sphi 0, %s119
      %s122 = sphi 0, %s121
      %s136 = sphi 0, %s122
      %s140 = sphi 0, %s140
      %s142 = sphi 0, %s140
      %s143 = sphi 0, %s142
      %s157 = sphi 0, %s143
      %s165 = sphi 0, %s167
      %s168 = sphi 0, %s165
      %s169 = sphi 0, %s168
      %s185 = sphi 0, %s169
    $region4: #{tpu_custom_call.1} parent=1 // loop_header_branch
      %18 = sbr.rel (%p16) target = $region8
    $region5: #{tpu_custom_call.1} parent=1 // loop_body
      %s20 = ssub.s32 %s15, 1
      %s21 = ssub.s32 %s15, 2
      %s28 = sadd.s32 1, %s23
      %p29 = scmp.ge.s32.totalorder %s28, 1
      %s30 = scalar_select %p29, 0, %s28
      %s31 = sadd.s32 1, %s22
      %s32 = scalar_select %p29, %s31, %s22
      %p33 = scmp.ge.s32.totalorder %s32, 2
      %s34 = scalar_select %p33, 0, %s32
      %s36 = sadd.s32 %s35, 1
      %p39 = scmp.eq.s32.totalorder %s15, 1
      %p40 = scmp.ne.s32.totalorder %s35, %s37
      %p41 = scmp.eq.s32.totalorder %s15, 0
      %p42 = por %p40, %p41
      %p43 = scmp.ne.s32.totalorder %s35, %s37
      %p44 = scmp.eq.s32.totalorder %s20, 1
      %p45 = por %p43, %p44
      %p46 = scmp.ne.s32.totalorder %s37, %s38
      %p47 = scmp.eq.s32.totalorder %s20, 0
      %p48 = por %p46, %p47
      %p49 = scmp.ne.s32.totalorder %s37, %s38
      %p50 = scmp.eq.s32.totalorder %s21, 1
      %p51 = por %p49, %p50
      %p53 = scmp.ne.s32.totalorder %s38, %s52
      %p54 = scmp.eq.s32.totalorder %s21, 0
      %p55 = por %p53, %p54
      %s57 = sadd.s32 %s56, 1
      %p60 = scmp.eq.s32.totalorder %s15, 1
      %p61 = scmp.ne.s32.totalorder %s56, %s58
      %p62 = scmp.eq.s32.totalorder %s15, 0
      %p63 = por %p61, %p62
      %p64 = scmp.ne.s32.totalorder %s56, %s58
      %p65 = scmp.eq.s32.totalorder %s20, 1
      %p66 = por %p64, %p65
      %p67 = scmp.ne.s32.totalorder %s58, %s59
      %p68 = scmp.eq.s32.totalorder %s20, 0
      %p69 = por %p67, %p68
      %p70 = scmp.ne.s32.totalorder %s58, %s59
      %p71 = scmp.eq.s32.totalorder %s21, 1
      %p72 = por %p70, %p71
      %p74 = scmp.ne.s32.totalorder %s59, %s73
      %p75 = scmp.eq.s32.totalorder %s21, 0
      %p76 = por %p74, %p75
      %s78 = sadd.s32 %s77, 1
      %p81 = scmp.eq.s32.totalorder %s15, 1
      %p82 = scmp.ne.s32.totalorder %s77, %s79
      %p83 = scmp.eq.s32.totalorder %s15, 0
      %p84 = por %p82, %p83
      %p85 = scmp.ne.s32.totalorder %s77, %s79
      %p86 = scmp.eq.s32.totalorder %s20, 1
      %p87 = por %p85, %p86
      %p88 = scmp.ne.s32.totalorder %s79, %s80
      %p89 = scmp.eq.s32.totalorder %s20, 0
      %p90 = por %p88, %p89
      %p91 = scmp.ne.s32.totalorder %s79, %s80
      %p92 = scmp.eq.s32.totalorder %s21, 1
      %p93 = por %p91, %p92
      %p95 = scmp.ne.s32.totalorder %s80, %s94
      %p96 = scmp.eq.s32.totalorder %s21, 0
      %p97 = por %p95, %p96
      %s99 = sadd.s32 %s98, 1
      %p102 = scmp.eq.s32.totalorder %s15, 1
      %p103 = scmp.ne.s32.totalorder %s98, %s100
      %p104 = scmp.eq.s32.totalorder %s15, 0
      %p105 = por %p103, %p104
      %p106 = scmp.ne.s32.totalorder %s98, %s100
      %p107 = scmp.eq.s32.totalorder %s20, 1
      %p108 = por %p106, %p107
      %p109 = scmp.ne.s32.totalorder %s100, %s101
      %p110 = scmp.eq.s32.totalorder %s20, 0
      %p111 = por %p109, %p110
      %p112 = scmp.ne.s32.totalorder %s100, %s101
      %p113 = scmp.eq.s32.totalorder %s21, 1
      %p114 = por %p112, %p113
      %p116 = scmp.ne.s32.totalorder %s101, %s115
      %p117 = scmp.eq.s32.totalorder %s21, 0
      %p118 = por %p116, %p117
      %s120 = sadd.s32 %s119, 1
      %p123 = scmp.eq.s32.totalorder %s15, 1
      %p124 = scmp.ne.s32.totalorder %s119, %s121
      %p125 = scmp.eq.s32.totalorder %s15, 0
      %p126 = por %p124, %p125
      %p127 = scmp.ne.s32.totalorder %s119, %s121
      %p128 = scmp.eq.s32.totalorder %s20, 1
      %p129 = por %p127, %p128
      %p130 = scmp.ne.s32.totalorder %s121, %s122
      %p131 = scmp.eq.s32.totalorder %s20, 0
      %p132 = por %p130, %p131
      %p133 = scmp.ne.s32.totalorder %s121, %s122
      %p134 = scmp.eq.s32.totalorder %s21, 1
      %p135 = por %p133, %p134
      %p137 = scmp.ne.s32.totalorder %s122, %s136
      %p138 = scmp.eq.s32.totalorder %s21, 0
      %p139 = por %p137, %p138
      %s141 = sadd.s32 %s140, 1
      %p144 = scmp.eq.s32.totalorder %s15, 1
      %p145 = scmp.ne.s32.totalorder %s140, %s142
      %p146 = scmp.eq.s32.totalorder %s15, 0
      %p147 = por %p145, %p146
      %p148 = scmp.ne.s32.totalorder %s140, %s142
      %p149 = scmp.eq.s32.totalorder %s20, 1
      %p150 = por %p148, %p149
      %p151 = scmp.ne.s32.totalorder %s142, %s143
      %p152 = scmp.eq.s32.totalorder %s20, 0
      %p153 = por %p151, %p152
      %p154 = scmp.ne.s32.totalorder %s142, %s143
      %p155 = scmp.eq.s32.totalorder %s21, 1
      %p156 = por %p154, %p155
      %p158 = scmp.ne.s32.totalorder %s143, %s157
      %p159 = scmp.eq.s32.totalorder %s21, 0
      %p160 = por %p158, %p159
      %s161 = ssub.s32 %s22, %s34
      %s162 = ssub.s32 %s23, %s30
      %s163 = sor.u32 %s161, %s162
      %p164 = scmp.eq.s32.totalorder %s163, 0
      %s166 = sadd.s32 %s165, 1
      %s167 = scalar_select %p164, %s165, %s166
      %p170 = pneg %p164
      %p171 = scmp.eq.s32.totalorder %s15, 1
      %p172 = por %p170, %p171
      %p173 = scmp.ne.s32.totalorder %s165, %s168
      %p174 = scmp.eq.s32.totalorder %s15, 0
      %p175 = por %p173, %p174
      %p176 = scmp.ne.s32.totalorder %s165, %s168
      %p177 = scmp.eq.s32.totalorder %s20, 1
      %p178 = por %p176, %p177
      %p179 = scmp.ne.s32.totalorder %s168, %s169
      %p180 = scmp.eq.s32.totalorder %s20, 0
      %p181 = por %p179, %p180
      %p182 = scmp.ne.s32.totalorder %s168, %s169
      %p183 = scmp.eq.s32.totalorder %s21, 1
      %p184 = por %p182, %p183
      %p186 = scmp.ne.s32.totalorder %s169, %s185
      %p187 = scmp.eq.s32.totalorder %s21, 0
      %p188 = por %p186, %p187
      %p189 = scmp.le.s32.totalorder 1, %s15
      %p190 = scmp.lt.s32.totalorder %s15, 3
      %p191 = pnand %p189, %p190
      %p192 = pneg %p191
      // Predicated region
      $region9: #{tpu_custom_call.1} parent=5 // pred_check
        _
      $region10: #{tpu_custom_call.1} parent=5 // pred_check_branch
        %194 = sbr.rel (%p191) target = $region12
      $region11: #{tpu_custom_call.1} parent=5 // pred_region
        %s195 = ssub.s32 %s15, 1
        // Predicated region
        $region13: #{tpu_custom_call.1} parent=11 // pred_check
          %p196 = pneg %p48
        $region14: #{tpu_custom_call.1} parent=11 // pred_check_branch
          %198 = sbr.rel (%p196) target = $region16
        $region15: #{tpu_custom_call.1} parent=11 // pred_region
          %200 = vsyncadd [#allocation5], 0
          %s201 = sshll.u32 %s1, 4
          %s202 = int_to_ptr.hbm [resolvable:$true] %s201
          %s203 = sshll.u32 [#allocation4], 4
          %s204 = int_to_ptr.vmem [resolvable:$true] %s203
          %209 = dma.hbm_to_vmem [thread:$0]  %s202, 18432, %s204, [#allocation5], 128, 128, 8
        $region16: #{tpu_custom_call.1} parent=11 // pred_fallthru
          _
        // Predicated region
        $region17: #{tpu_custom_call.1} parent=11 // pred_check
          %p210 = pneg %p69
        $region18: #{tpu_custom_call.1} parent=11 // pred_check_branch
          %212 = sbr.rel (%p210) target = $region20
        $region19: #{tpu_custom_call.1} parent=11 // pred_region
          _
        $region20: #{tpu_custom_call.1} parent=11 // pred_fallthru
          _
        // Predicated region
        $region21: #{tpu_custom_call.1} parent=11 // pred_check
          %p213 = pneg %p90
        $region22: #{tpu_custom_call.1} parent=11 // pred_check_branch
          %215 = sbr.rel (%p213) target = $region24
        $region23: #{tpu_custom_call.1} parent=11 // pred_region
          %217 = vsyncadd [#allocation7], 0
          %s218 = sshll.u32 %s3, 4
          %s219 = int_to_ptr.hbm [resolvable:$true] %s218
          %s220 = sshll.u32 [#allocation6], 4
          %s221 = int_to_ptr.vmem [resolvable:$true] %s220
          %226 = dma.hbm_to_vmem [thread:$0]  %s219, 2048, %s221, [#allocation7], 128, 128, 8
        $region24: #{tpu_custom_call.1} parent=11 // pred_fallthru
          _
        // Predicated region
        $region25: #{tpu_custom_call.1} parent=11 // pred_check
          %p227 = pneg %p111
        $region26: #{tpu_custom_call.1} parent=11 // pred_check_branch
          %229 = sbr.rel (%p227) target = $region28
        $region27: #{tpu_custom_call.1} parent=11 // pred_region
          _
        $region28: #{tpu_custom_call.1} parent=11 // pred_fallthru
          _
        // Predicated region
        $region29: #{tpu_custom_call.1} parent=11 // pred_check
          %p230 = pneg %p132
        $region30: #{tpu_custom_call.1} parent=11 // pred_check_branch
          %232 = sbr.rel (%p230) target = $region32
        $region31: #{tpu_custom_call.1} parent=11 // pred_region
          _
        $region32: #{tpu_custom_call.1} parent=11 // pred_fallthru
          _
        // Predicated region
        $region33: #{tpu_custom_call.1} parent=11 // pred_check
          %p233 = pneg %p153
        $region34: #{tpu_custom_call.1} parent=11 // pred_check_branch
          %235 = sbr.rel (%p233) target = $region36
        $region35: #{tpu_custom_call.1} parent=11 // pred_region
          _
        $region36: #{tpu_custom_call.1} parent=11 // pred_fallthru
          _
      $region12: #{tpu_custom_call.1} parent=5 // pred_fallthru
        _
      %p236 = scmp.lt.s32.totalorder %s15, 2
      // Predicated region
      $region37: #{tpu_custom_call.1} parent=5 // pred_check
        %p237 = pneg %p236
      $region38: #{tpu_custom_call.1} parent=5 // pred_check_branch
        %239 = sbr.rel (%p237) target = $region40
      $region39: #{tpu_custom_call.1} parent=5 // pred_region
        _
      $region40: #{tpu_custom_call.1} parent=5 // pred_fallthru
        _
      %p240 = scmp.le.s32.totalorder 1, %s15
      %p241 = scmp.lt.s32.totalorder %s15, 3
      %p242 = pnand %p240, %p241
      %p243 = pneg %p242
      // Predicated region
      $region41: #{tpu_custom_call.1} parent=5 // pred_check
        _
      $region42: #{tpu_custom_call.1} parent=5 // pred_check_branch
        %245 = sbr.rel (%p242) target = $region44
      $region43: #{tpu_custom_call.1} parent=5 // pred_region
        %s246 = ssub.s32 %s15, 1
        // Predicated region
        $region45: #{tpu_custom_call.1} parent=43 // pred_check
          %p247 = pneg %p48
        $region46: #{tpu_custom_call.1} parent=43 // pred_check_branch
          %249 = sbr.rel (%p247) target = $region48
        $region47: #{tpu_custom_call.1} parent=43 // pred_region
          %251 = dma.done [#allocation5], 18432
        $region48: #{tpu_custom_call.1} parent=43 // pred_fallthru
          _
        // Predicated region
        $region49: #{tpu_custom_call.1} parent=43 // pred_check
          %p252 = pneg %p90
        $region50: #{tpu_custom_call.1} parent=43 // pred_check_branch
          %254 = sbr.rel (%p252) target = $region52
        $region51: #{tpu_custom_call.1} parent=43 // pred_region
          %256 = dma.done [#allocation7], 2048
        $region52: #{tpu_custom_call.1} parent=43 // pred_fallthru
          _
        %p257 = pneg %p48
        %p258 = pneg %p45
        %p259 = pneg %p69
        %p260 = pneg %p66
        %p261 = pneg %p90
        %p262 = pneg %p87
        %p263 = pneg %p111
        %p264 = pneg %p108
        %p265 = pneg %p132
        %p266 = pneg %p129
        %p267 = pneg %p153
        %p268 = pneg %p150
        %p269 = pneg %p181
        %p270 = pneg %p178
        %s271 = smul.u32 2, %s25
        %p272 = scmp.lt.s32.totalorder %s24, 1
        %s273 = scalar_select %p272, %s24, 1
        %p274 = scmp.lt.s32.totalorder %s271, 1
        %s275 = scalar_select %p274, %s271, 1
        %s276 = smul.addr %s273, 2
        %s277 = sadd.s32 %s275, %s276
        %s278 = smul.addr %s277, 8
        %s279 = scalar_lea.vmem %s7, %s278
        %s280 = smul.u32 2, %s25
        %p281 = scmp.lt.s32.totalorder %s24, 1
        %s282 = scalar_select %p281, %s24, 1
        %p283 = scmp.lt.s32.totalorder %s280, 1
        %s284 = scalar_select %p283, %s280, 1
        %s285 = smul.addr %s282, 2
        %s286 = sadd.s32 %s284, %s285
        %s287 = smul.addr %s286, 8
        %s288 = scalar_lea.vmem %s7, %s287
        %s289 = smul.u32 2, %s25
        %s290 = smul.u32 %s25, 16
        %s291 = smul.u32 %s24, 24
        %s292 = sadd.s32 %s290, %s291
        %s293 = scalar_lea.hbm %s0, %s292
        // Predicated region
        $region53: #{tpu_custom_call.1} parent=43 // pred_check
          _
        $region54: #{tpu_custom_call.1} parent=43 // pred_check_branch
          %295 = sbr.rel target = $region56
        $region55: #{tpu_custom_call.1} parent=43 // pred_region
          %296 = sst [smem:[#allocation10]] [#allocation9]
          %297 = sst [smem:[#allocation11]] [#allocation8]
        $region56: #{tpu_custom_call.1} parent=43 // pred_fallthru
          _
        %299 = shalt.err (0)
        %s301 = sshll.u32 %s293, 4
        %s302 = int_to_ptr.hbm [resolvable:$true] %s301
        %s303 = sshll.u32 [#allocation2], 4
        %s304 = int_to_ptr.vmem [resolvable:$true] %s303
        %306 = dma.hbm_to_vmem [thread:$0]  %s302, 384, %s304, [#allocation3]
        %s307 = smul.u32 24, 1
        %s308 = sshll.u32 %s307, 4
        %309 = dma.done [#allocation3], %s308
        %v310 = vld [vmem:[#allocation2] sm:$0xff]
        %v311 = vld [vmem:[#allocation2 + $0x8] sm:$0xff]
        %v312 = vld [vmem:[#allocation2 + $0x10] sm:$0xff]
        %v313 = vrot.slane %v310, 1
        %v314 = vrot.slane %v311, 1
        %v315 = vrot.slane %v312, 1
        %v316 = vlaneseq
        %v317 = vshrl.u32 %v316, 7
        %vm318 = vcmp.lt.s32.totalorder %v317, 7
        %v319 = vsel %vm318, %v314, %v315
        %v320 = vsel %vm318, %v313, %v314
        %v321 = vsel %vm318, %v315, %v313
        %v322 = vrot.slane %v310, 2
        %v323 = vrot.slane %v311, 2
        %v324 = vrot.slane %v312, 2
        %vm325 = vcmp.lt.s32.totalorder %v317, 6
        %v326 = vsel %vm325, %v323, %v324
        %v327 = vsel %vm325, %v322, %v323
        %v328 = vsel %vm325, %v324, %v322
        %v329 = vrot.slane %v310, 3
        %v330 = vrot.slane %v311, 3
        %v331 = vrot.slane %v312, 3
        %vm332 = vcmp.lt.s32.totalorder %v317, 5
        %v333 = vsel %vm332, %v330, %v331
        %v334 = vsel %vm332, %v329, %v330
        %v335 = vsel %vm332, %v331, %v329
        %v336 = vrot.slane %v310, 4
        %v337 = vrot.slane %v311, 4
        %v338 = vrot.slane %v312, 4
        %vm339 = vcmp.lt.s32.totalorder %v317, 4
        %v340 = vsel %vm339, %v337, %v338
        %v341 = vsel %vm339, %v336, %v337
        %v342 = vsel %vm339, %v338, %v336
        %v343 = vrot.slane %v310, 5
        %v344 = vrot.slane %v311, 5
        %v345 = vrot.slane %v312, 5
        %vm346 = vcmp.lt.s32.totalorder %v317, 3
        %v347 = vsel %vm346, %v344, %v345
        %v348 = vsel %vm346, %v343, %v344
        %v349 = vsel %vm346, %v345, %v343
        %v350 = vrot.slane %v310, 6
        %v351 = vrot.slane %v311, 6
        %v352 = vrot.slane %v312, 6
        %vm353 = vcmp.lt.s32.totalorder %v317, 2
        %v354 = vsel %vm353, %v351, %v352
        %v355 = vsel %vm353, %v350, %v351
        %v356 = vsel %vm353, %v352, %v350
        %v357 = vrot.slane %v310, 7
        %v358 = vrot.slane %v311, 7
        %v359 = vrot.slane %v312, 7
        %vm360 = vcmp.lt.s32.totalorder %v317, 1
        %v361 = vsel %vm360, %v358, %v359
        %v362 = vsel %vm360, %v357, %v358
        %v363 = vsel %vm360, %v359, %v357
        %v364 = vld [vmem:[#allocation4] sm:$0xff]
        %v365 = vld [vmem:[#allocation4 + $0x8] sm:$0xff]
        %v366 = vld [vmem:[#allocation4 + $0x10] sm:$0xff]
        %v367 = vld [vmem:[#allocation4 + $0x18] sm:$0xff]
        %v368 = vld [vmem:[#allocation4 + $0x20] sm:$0xff]
        %v369 = vld [vmem:[#allocation4 + $0x28] sm:$0xff]
        %v370 = vld [vmem:[#allocation4 + $0x30] sm:$0xff]
        %v371 = vld [vmem:[#allocation4 + $0x38] sm:$0xff]
        %v372 = vld [vmem:[#allocation4 + $0x40] sm:$0xff]
        %v373 = vld [vmem:[#allocation4 + $0x48] sm:$0xff]
        %v374 = vld [vmem:[#allocation4 + $0x50] sm:$0xff]
        %v375 = vld [vmem:[#allocation4 + $0x58] sm:$0xff]
        %v376 = vld [vmem:[#allocation4 + $0x60] sm:$0xff]
        %v377 = vld [vmem:[#allocation4 + $0x68] sm:$0xff]
        %v378 = vld [vmem:[#allocation4 + $0x70] sm:$0xff]
        %v379 = vld [vmem:[#allocation4 + $0x78] sm:$0xff]
        %v380 = vld [vmem:[#allocation4 + $0x80] sm:$0xff]
        %v381 = vld [vmem:[#allocation4 + $0x88] sm:$0xff]
        %v382 = vld [vmem:[#allocation4 + $0x90] sm:$0xff]
        %v383 = vld [vmem:[#allocation4 + $0x98] sm:$0xff]
        %v384 = vld [vmem:[#allocation4 + $0xa0] sm:$0xff]
        %v385 = vld [vmem:[#allocation4 + $0xa8] sm:$0xff]
        %v386 = vld [vmem:[#allocation4 + $0xb0] sm:$0xff]
        %v387 = vld [vmem:[#allocation4 + $0xb8] sm:$0xff]
        %v388 = vld [vmem:[#allocation4 + $0xc0] sm:$0xff]
        %v389 = vld [vmem:[#allocation4 + $0xc8] sm:$0xff]
        %v390 = vld [vmem:[#allocation4 + $0xd0] sm:$0xff]
        %v391 = vld [vmem:[#allocation4 + $0xd8] sm:$0xff]
        %v392 = vld [vmem:[#allocation4 + $0xe0] sm:$0xff]
        %v393 = vld [vmem:[#allocation4 + $0xe8] sm:$0xff]
        %v394 = vld [vmem:[#allocation4 + $0xf0] sm:$0xff]
        %v395 = vld [vmem:[#allocation4 + $0xf8] sm:$0xff]
        %v396 = vld [vmem:[#allocation4 + $0x100] sm:$0xff]
        %v397 = vld [vmem:[#allocation4 + $0x108] sm:$0xff]
        %v398 = vld [vmem:[#allocation4 + $0x110] sm:$0xff]
        %v399 = vld [vmem:[#allocation4 + $0x118] sm:$0xff]
        %v400 = vld [vmem:[#allocation4 + $0x120] sm:$0xff]
        %v401 = vld [vmem:[#allocation4 + $0x128] sm:$0xff]
        %v402 = vld [vmem:[#allocation4 + $0x130] sm:$0xff]
        %v403 = vld [vmem:[#allocation4 + $0x138] sm:$0xff]
        %v404 = vld [vmem:[#allocation4 + $0x140] sm:$0xff]
        %v405 = vld [vmem:[#allocation4 + $0x148] sm:$0xff]
        %v406 = vld [vmem:[#allocation4 + $0x150] sm:$0xff]
        %v407 = vld [vmem:[#allocation4 + $0x158] sm:$0xff]
        %v408 = vld [vmem:[#allocation4 + $0x160] sm:$0xff]
        %v409 = vld [vmem:[#allocation4 + $0x168] sm:$0xff]
        %v410 = vld [vmem:[#allocation4 + $0x170] sm:$0xff]
        %v411 = vld [vmem:[#allocation4 + $0x178] sm:$0xff]
        %v412 = vld [vmem:[#allocation4 + $0x180] sm:$0xff]
        %v413 = vld [vmem:[#allocation4 + $0x188] sm:$0xff]
        %v414 = vld [vmem:[#allocation4 + $0x190] sm:$0xff]
        %v415 = vld [vmem:[#allocation4 + $0x198] sm:$0xff]
        %v416 = vld [vmem:[#allocation4 + $0x1a0] sm:$0xff]
        %v417 = vld [vmem:[#allocation4 + $0x1a8] sm:$0xff]
        %v418 = vld [vmem:[#allocation4 + $0x1b0] sm:$0xff]
        %v419 = vld [vmem:[#allocation4 + $0x1b8] sm:$0xff]
        %v420 = vld [vmem:[#allocation4 + $0x1c0] sm:$0xff]
        %v421 = vld [vmem:[#allocation4 + $0x1c8] sm:$0xff]
        %v422 = vld [vmem:[#allocation4 + $0x1d0] sm:$0xff]
        %v423 = vld [vmem:[#allocation4 + $0x1d8] sm:$0xff]
        %v424 = vld [vmem:[#allocation4 + $0x1e0] sm:$0xff]
        %v425 = vld [vmem:[#allocation4 + $0x1e8] sm:$0xff]
        %v426 = vld [vmem:[#allocation4 + $0x1f0] sm:$0xff]
        %v427 = vld [vmem:[#allocation4 + $0x1f8] sm:$0xff]
        %v428 = vld [vmem:[#allocation4 + $0x200] sm:$0xff]
        %v429 = vld [vmem:[#allocation4 + $0x208] sm:$0xff]
        %v430 = vld [vmem:[#allocation4 + $0x210] sm:$0xff]
        %v431 = vld [vmem:[#allocation4 + $0x218] sm:$0xff]
        %v432 = vld [vmem:[#allocation4 + $0x220] sm:$0xff]
        %v433 = vld [vmem:[#allocation4 + $0x228] sm:$0xff]
        %v434 = vld [vmem:[#allocation4 + $0x230] sm:$0xff]
        %v435 = vld [vmem:[#allocation4 + $0x238] sm:$0xff]
        %v436 = vld [vmem:[#allocation4 + $0x240] sm:$0xff]
        %v437 = vld [vmem:[#allocation4 + $0x248] sm:$0xff]
        %v438 = vld [vmem:[#allocation4 + $0x250] sm:$0xff]
        %v439 = vld [vmem:[#allocation4 + $0x258] sm:$0xff]
        %v440 = vld [vmem:[#allocation4 + $0x260] sm:$0xff]
        %v441 = vld [vmem:[#allocation4 + $0x268] sm:$0xff]
        %v442 = vld [vmem:[#allocation4 + $0x270] sm:$0xff]
        %v443 = vld [vmem:[#allocation4 + $0x278] sm:$0xff]
        %v444 = vld [vmem:[#allocation4 + $0x280] sm:$0xff]
        %v445 = vld [vmem:[#allocation4 + $0x288] sm:$0xff]
        %v446 = vld [vmem:[#allocation4 + $0x290] sm:$0xff]
        %v447 = vld [vmem:[#allocation4 + $0x298] sm:$0xff]
        %v448 = vld [vmem:[#allocation4 + $0x2a0] sm:$0xff]
        %v449 = vld [vmem:[#allocation4 + $0x2a8] sm:$0xff]
        %v450 = vld [vmem:[#allocation4 + $0x2b0] sm:$0xff]
        %v451 = vld [vmem:[#allocation4 + $0x2b8] sm:$0xff]
        %v452 = vld [vmem:[#allocation4 + $0x2c0] sm:$0xff]
        %v453 = vld [vmem:[#allocation4 + $0x2c8] sm:$0xff]
        %v454 = vld [vmem:[#allocation4 + $0x2d0] sm:$0xff]
        %v455 = vld [vmem:[#allocation4 + $0x2d8] sm:$0xff]
        %v456 = vld [vmem:[#allocation4 + $0x2e0] sm:$0xff]
        %v457 = vld [vmem:[#allocation4 + $0x2e8] sm:$0xff]
        %v458 = vld [vmem:[#allocation4 + $0x2f0] sm:$0xff]
        %v459 = vld [vmem:[#allocation4 + $0x2f8] sm:$0xff]
        %v460 = vld [vmem:[#allocation4 + $0x300] sm:$0xff]
        %v461 = vld [vmem:[#allocation4 + $0x308] sm:$0xff]
        %v462 = vld [vmem:[#allocation4 + $0x310] sm:$0xff]
        %v463 = vld [vmem:[#allocation4 + $0x318] sm:$0xff]
        %v464 = vld [vmem:[#allocation4 + $0x320] sm:$0xff]
        %v465 = vld [vmem:[#allocation4 + $0x328] sm:$0xff]
        %v466 = vld [vmem:[#allocation4 + $0x330] sm:$0xff]
        %v467 = vld [vmem:[#allocation4 + $0x338] sm:$0xff]
        %v468 = vld [vmem:[#allocation4 + $0x340] sm:$0xff]
        %v469 = vld [vmem:[#allocation4 + $0x348] sm:$0xff]
        %v470 = vld [vmem:[#allocation4 + $0x350] sm:$0xff]
        %v471 = vld [vmem:[#allocation4 + $0x358] sm:$0xff]
        %v472 = vld [vmem:[#allocation4 + $0x360] sm:$0xff]
        %v473 = vld [vmem:[#allocation4 + $0x368] sm:$0xff]
        %v474 = vld [vmem:[#allocation4 + $0x370] sm:$0xff]
        %v475 = vld [vmem:[#allocation4 + $0x378] sm:$0xff]
        %v476 = vld [vmem:[#allocation4 + $0x380] sm:$0xff]
        %v477 = vld [vmem:[#allocation4 + $0x388] sm:$0xff]
        %v478 = vld [vmem:[#allocation4 + $0x390] sm:$0xff]
        %v479 = vld [vmem:[#allocation4 + $0x398] sm:$0xff]
        %v480 = vld [vmem:[#allocation4 + $0x3a0] sm:$0xff]
        %v481 = vld [vmem:[#allocation4 + $0x3a8] sm:$0xff]
        %v482 = vld [vmem:[#allocation4 + $0x3b0] sm:$0xff]
        %v483 = vld [vmem:[#allocation4 + $0x3b8] sm:$0xff]
        %v484 = vld [vmem:[#allocation4 + $0x3c0] sm:$0xff]
        %v485 = vld [vmem:[#allocation4 + $0x3c8] sm:$0xff]
        %v486 = vld [vmem:[#allocation4 + $0x3d0] sm:$0xff]
        %v487 = vld [vmem:[#allocation4 + $0x3d8] sm:$0xff]
        %v488 = vld [vmem:[#allocation4 + $0x3e0] sm:$0xff]
        %v489 = vld [vmem:[#allocation4 + $0x3e8] sm:$0xff]
        %v490 = vld [vmem:[#allocation4 + $0x3f0] sm:$0xff]
        %v491 = vld [vmem:[#allocation4 + $0x3f8] sm:$0xff]
        %v492 = vld [vmem:[#allocation4 + $0x400] sm:$0xff]
        %v493 = vld [vmem:[#allocation4 + $0x408] sm:$0xff]
        %v494 = vld [vmem:[#allocation4 + $0x410] sm:$0xff]
        %v495 = vld [vmem:[#allocation4 + $0x418] sm:$0xff]
        %v496 = vld [vmem:[#allocation4 + $0x420] sm:$0xff]
        %v497 = vld [vmem:[#allocation4 + $0x428] sm:$0xff]
        %v498 = vld [vmem:[#allocation4 + $0x430] sm:$0xff]
        %v499 = vld [vmem:[#allocation4 + $0x438] sm:$0xff]
        %v500 = vld [vmem:[#allocation4 + $0x440] sm:$0xff]
        %v501 = vld [vmem:[#allocation4 + $0x448] sm:$0xff]
        %v502 = vld [vmem:[#allocation4 + $0x450] sm:$0xff]
        %v503 = vld [vmem:[#allocation4 + $0x458] sm:$0xff]
        %v504 = vld [vmem:[#allocation4 + $0x460] sm:$0xff]
        %v505 = vld [vmem:[#allocation4 + $0x468] sm:$0xff]
        %v506 = vld [vmem:[#allocation4 + $0x470] sm:$0xff]
        %v507 = vld [vmem:[#allocation4 + $0x478] sm:$0xff]
        %v508 = vld [vmem:[%s2] sm:$0x1]
        %v510 = vperm.slane %v508, 0
        %512 = vmatpush.msra.mxu0 %v379
        %513 = vmatpush.msra.mxu0 %v378
        %514 = vmatpush.msra.mxu0 %v377
        %515 = vmatpush.msra.mxu0 %v376
        %516 = vmatpush.msra.mxu0 %v375
        %517 = vmatpush.msra.mxu0 %v374
        %518 = vmatpush.msra.mxu0 %v373
        %519 = vmatpush.msra.mxu0 %v372
        %520 = vmatpush.msra.mxu0 %v371
        %521 = vmatpush.msra.mxu0 %v370
        %522 = vmatpush.msra.mxu0 %v369
        %523 = vmatpush.msra.mxu0 %v368
        %524 = vmatpush.msra.mxu0 %v367
        %525 = vmatpush.msra.mxu0 %v366
        %526 = vmatpush.msra.mxu0 %v365
        %527 = vmatpush.msra.mxu0 %v364
        %528 = vmatmul.f32.gmra.mxu0 %v310
        %v529 = vpop.f32.mrf.mxu0
        %v530 = vadd.f32 %v510, %v529
        %531 = vmatmul.f32.gmra.mxu0 %v311
        %v532 = vpop.f32.mrf.mxu0
        %v533 = vadd.f32 %v510, %v532
        %534 = vmatmul.f32.gmra.mxu0 %v312
        %v535 = vpop.f32.mrf.mxu0
        %v536 = vadd.f32 %v510, %v535
        %537 = vdwg.mxu0
        %538 = vmatpush.msra.mxu0 %v395
        %539 = vmatpush.msra.mxu0 %v394
        %540 = vmatpush.msra.mxu0 %v393
        %541 = vmatpush.msra.mxu0 %v392
        %542 = vmatpush.msra.mxu0 %v391
        %543 = vmatpush.msra.mxu0 %v390
        %544 = vmatpush.msra.mxu0 %v389
        %545 = vmatpush.msra.mxu0 %v388
        %546 = vmatpush.msra.mxu0 %v387
        %547 = vmatpush.msra.mxu0 %v386
        %548 = vmatpush.msra.mxu0 %v385
        %549 = vmatpush.msra.mxu0 %v384
        %550 = vmatpush.msra.mxu0 %v383
        %551 = vmatpush.msra.mxu0 %v382
        %552 = vmatpush.msra.mxu0 %v381
        %553 = vmatpush.msra.mxu0 %v380
        %554 = vmatmul.f32.gmra.mxu0 %v320
        %v555 = vpop.f32.mrf.mxu0
        %v556 = vadd.f32 %v530, %v555
        %557 = vmatmul.f32.gmra.mxu0 %v319
        %v558 = vpop.f32.mrf.mxu0
        %v559 = vadd.f32 %v533, %v558
        %560 = vmatmul.f32.gmra.mxu0 %v321
        %v561 = vpop.f32.mrf.mxu0
        %v562 = vadd.f32 %v536, %v561
        %563 = vdwg.mxu0
        %564 = vmatpush.msra.mxu0 %v411
        %565 = vmatpush.msra.mxu0 %v410
        %566 = vmatpush.msra.mxu0 %v409
        %567 = vmatpush.msra.mxu0 %v408
        %568 = vmatpush.msra.mxu0 %v407
        %569 = vmatpush.msra.mxu0 %v406
        %570 = vmatpush.msra.mxu0 %v405
        %571 = vmatpush.msra.mxu0 %v404
        %572 = vmatpush.msra.mxu0 %v403
        %573 = vmatpush.msra.mxu0 %v402
        %574 = vmatpush.msra.mxu0 %v401
        %575 = vmatpush.msra.mxu0 %v400
        %576 = vmatpush.msra.mxu0 %v399
        %577 = vmatpush.msra.mxu0 %v398
        %578 = vmatpush.msra.mxu0 %v397
        %579 = vmatpush.msra.mxu0 %v396
        %580 = vmatmul.f32.gmra.mxu0 %v327
        %v581 = vpop.f32.mrf.mxu0
        %v582 = vadd.f32 %v556, %v581
        %583 = vmatmul.f32.gmra.mxu0 %v326
        %v584 = vpop.f32.mrf.mxu0
        %v585 = vadd.f32 %v559, %v584
        %586 = vmatmul.f32.gmra.mxu0 %v328
        %v587 = vpop.f32.mrf.mxu0
        %v588 = vadd.f32 %v562, %v587
        %589 = vdwg.mxu0
        %590 = vmatpush.msra.mxu0 %v427
        %591 = vmatpush.msra.mxu0 %v426
        %592 = vmatpush.msra.mxu0 %v425
        %593 = vmatpush.msra.mxu0 %v424
        %594 = vmatpush.msra.mxu0 %v423
        %595 = vmatpush.msra.mxu0 %v422
        %596 = vmatpush.msra.mxu0 %v421
        %597 = vmatpush.msra.mxu0 %v420
        %598 = vmatpush.msra.mxu0 %v419
        %599 = vmatpush.msra.mxu0 %v418
        %600 = vmatpush.msra.mxu0 %v417
        %601 = vmatpush.msra.mxu0 %v416
        %602 = vmatpush.msra.mxu0 %v415
        %603 = vmatpush.msra.mxu0 %v414
        %604 = vmatpush.msra.mxu0 %v413
        %605 = vmatpush.msra.mxu0 %v412
        %606 = vmatmul.f32.gmra.mxu0 %v334
        %v607 = vpop.f32.mrf.mxu0
        %v608 = vadd.f32 %v582, %v607
        %609 = vmatmul.f32.gmra.mxu0 %v333
        %v610 = vpop.f32.mrf.mxu0
        %v611 = vadd.f32 %v585, %v610
        %612 = vmatmul.f32.gmra.mxu0 %v335
        %v613 = vpop.f32.mrf.mxu0
        %v614 = vadd.f32 %v588, %v613
        %615 = vdwg.mxu0
        %616 = vmatpush.msra.mxu0 %v443
        %617 = vmatpush.msra.mxu0 %v442
        %618 = vmatpush.msra.mxu0 %v441
        %619 = vmatpush.msra.mxu0 %v440
        %620 = vmatpush.msra.mxu0 %v439
        %621 = vmatpush.msra.mxu0 %v438
        %622 = vmatpush.msra.mxu0 %v437
        %623 = vmatpush.msra.mxu0 %v436
        %624 = vmatpush.msra.mxu0 %v435
        %625 = vmatpush.msra.mxu0 %v434
        %626 = vmatpush.msra.mxu0 %v433
        %627 = vmatpush.msra.mxu0 %v432
        %628 = vmatpush.msra.mxu0 %v431
        %629 = vmatpush.msra.mxu0 %v430
        %630 = vmatpush.msra.mxu0 %v429
        %631 = vmatpush.msra.mxu0 %v428
        %632 = vmatmul.f32.gmra.mxu0 %v341
        %v633 = vpop.f32.mrf.mxu0
        %v634 = vadd.f32 %v608, %v633
        %635 = vmatmul.f32.gmra.mxu0 %v340
        %v636 = vpop.f32.mrf.mxu0
        %v637 = vadd.f32 %v611, %v636
        %638 = vmatmul.f32.gmra.mxu0 %v342
        %v639 = vpop.f32.mrf.mxu0
        %v640 = vadd.f32 %v614, %v639
        %641 = vdwg.mxu0
        %642 = vmatpush.msra.mxu0 %v459
        %643 = vmatpush.msra.mxu0 %v458
        %644 = vmatpush.msra.mxu0 %v457
        %645 = vmatpush.msra.mxu0 %v456
        %646 = vmatpush.msra.mxu0 %v455
        %647 = vmatpush.msra.mxu0 %v454
        %648 = vmatpush.msra.mxu0 %v453
        %649 = vmatpush.msra.mxu0 %v452
        %650 = vmatpush.msra.mxu0 %v451
        %651 = vmatpush.msra.mxu0 %v450
        %652 = vmatpush.msra.mxu0 %v449
        %653 = vmatpush.msra.mxu0 %v448
        %654 = vmatpush.msra.mxu0 %v447
        %655 = vmatpush.msra.mxu0 %v446
        %656 = vmatpush.msra.mxu0 %v445
        %657 = vmatpush.msra.mxu0 %v444
        %658 = vmatmul.f32.gmra.mxu0 %v348
        %v659 = vpop.f32.mrf.mxu0
        %v660 = vadd.f32 %v634, %v659
        %661 = vmatmul.f32.gmra.mxu0 %v347
        %v662 = vpop.f32.mrf.mxu0
        %v663 = vadd.f32 %v637, %v662
        %664 = vmatmul.f32.gmra.mxu0 %v349
        %v665 = vpop.f32.mrf.mxu0
        %v666 = vadd.f32 %v640, %v665
        %667 = vdwg.mxu0
        %668 = vmatpush.msra.mxu0 %v475
        %669 = vmatpush.msra.mxu0 %v474
        %670 = vmatpush.msra.mxu0 %v473
        %671 = vmatpush.msra.mxu0 %v472
        %672 = vmatpush.msra.mxu0 %v471
        %673 = vmatpush.msra.mxu0 %v470
        %674 = vmatpush.msra.mxu0 %v469
        %675 = vmatpush.msra.mxu0 %v468
        %676 = vmatpush.msra.mxu0 %v467
        %677 = vmatpush.msra.mxu0 %v466
        %678 = vmatpush.msra.mxu0 %v465
        %679 = vmatpush.msra.mxu0 %v464
        %680 = vmatpush.msra.mxu0 %v463
        %681 = vmatpush.msra.mxu0 %v462
        %682 = vmatpush.msra.mxu0 %v461
        %683 = vmatpush.msra.mxu0 %v460
        %684 = vmatmul.f32.gmra.mxu0 %v355
        %v685 = vpop.f32.mrf.mxu0
        %v686 = vadd.f32 %v660, %v685
        %687 = vmatmul.f32.gmra.mxu0 %v354
        %v688 = vpop.f32.mrf.mxu0
        %v689 = vadd.f32 %v663, %v688
        %690 = vmatmul.f32.gmra.mxu0 %v356
        %v691 = vpop.f32.mrf.mxu0
        %v692 = vadd.f32 %v666, %v691
        %693 = vdwg.mxu0
        %694 = vmatpush.msra.mxu0 %v491
        %695 = vmatpush.msra.mxu0 %v490
        %696 = vmatpush.msra.mxu0 %v489
        %697 = vmatpush.msra.mxu0 %v488
        %698 = vmatpush.msra.mxu0 %v487
        %699 = vmatpush.msra.mxu0 %v486
        %700 = vmatpush.msra.mxu0 %v485
        %701 = vmatpush.msra.mxu0 %v484
        %702 = vmatpush.msra.mxu0 %v483
        %703 = vmatpush.msra.mxu0 %v482
        %704 = vmatpush.msra.mxu0 %v481
        %705 = vmatpush.msra.mxu0 %v480
        %706 = vmatpush.msra.mxu0 %v479
        %707 = vmatpush.msra.mxu0 %v478
        %708 = vmatpush.msra.mxu0 %v477
        %709 = vmatpush.msra.mxu0 %v476
        %710 = vmatmul.f32.gmra.mxu0 %v362
        %v711 = vpop.f32.mrf.mxu0
        %v712 = vadd.f32 %v686, %v711
        %713 = vmatmul.f32.gmra.mxu0 %v361
        %v714 = vpop.f32.mrf.mxu0
        %v715 = vadd.f32 %v689, %v714
        %716 = vmatmul.f32.gmra.mxu0 %v363
        %v717 = vpop.f32.mrf.mxu0
        %v718 = vadd.f32 %v692, %v717
        %719 = vdwg.mxu0
        %720 = vmatpush.msra.mxu0 %v507
        %721 = vmatpush.msra.mxu0 %v506
        %722 = vmatpush.msra.mxu0 %v505
        %723 = vmatpush.msra.mxu0 %v504
        %724 = vmatpush.msra.mxu0 %v503
        %725 = vmatpush.msra.mxu0 %v502
        %726 = vmatpush.msra.mxu0 %v501
        %727 = vmatpush.msra.mxu0 %v500
        %728 = vmatpush.msra.mxu0 %v499
        %729 = vmatpush.msra.mxu0 %v498
        %730 = vmatpush.msra.mxu0 %v497
        %731 = vmatpush.msra.mxu0 %v496
        %732 = vmatpush.msra.mxu0 %v495
        %733 = vmatpush.msra.mxu0 %v494
        %734 = vmatpush.msra.mxu0 %v493
        %735 = vmatpush.msra.mxu0 %v492
        %736 = vmatmul.f32.gmra.mxu0 %v311
        %v737 = vpop.f32.mrf.mxu0
        %v738 = vadd.f32 %v712, %v737
        %739 = vmatmul.f32.gmra.mxu0 %v312
        %v740 = vpop.f32.mrf.mxu0
        %v741 = vadd.f32 %v715, %v740
        %742 = vmatmul.f32.gmra.mxu0 %v310
        %v743 = vpop.f32.mrf.mxu0
        %v744 = vadd.f32 %v718, %v743
        %745 = vdwg.mxu0
        %v746 = vmax.f32 %v738, 0.0
        %v747 = vmax.f32 %v741, 0.0
        %v748 = vmax.f32 %v744, 0.0
        %v749 = vld [vmem:[#allocation6] sm:$0xff]
        %v750 = vld [vmem:[#allocation6 + $0x8] sm:$0xff]
        %v751 = vld [vmem:[#allocation6 + $0x10] sm:$0xff]
        %v752 = vld [vmem:[#allocation6 + $0x18] sm:$0xff]
        %v753 = vld [vmem:[#allocation6 + $0x20] sm:$0xff]
        %v754 = vld [vmem:[#allocation6 + $0x28] sm:$0xff]
        %v755 = vld [vmem:[#allocation6 + $0x30] sm:$0xff]
        %v756 = vld [vmem:[#allocation6 + $0x38] sm:$0xff]
        %v757 = vld [vmem:[#allocation6 + $0x40] sm:$0xff]
        %v758 = vld [vmem:[#allocation6 + $0x48] sm:$0xff]
        %v759 = vld [vmem:[#allocation6 + $0x50] sm:$0xff]
        %v760 = vld [vmem:[#allocation6 + $0x58] sm:$0xff]
        %v761 = vld [vmem:[#allocation6 + $0x60] sm:$0xff]
        %v762 = vld [vmem:[#allocation6 + $0x68] sm:$0xff]
        %v763 = vld [vmem:[#allocation6 + $0x70] sm:$0xff]
        %v764 = vld [vmem:[#allocation6 + $0x78] sm:$0xff]
        %765 = vmatpush.msra.mxu0 %v764
        %766 = vmatpush.msra.mxu0 %v763
        %767 = vmatpush.msra.mxu0 %v762
        %768 = vmatpush.msra.mxu0 %v761
        %769 = vmatpush.msra.mxu0 %v760
        %770 = vmatpush.msra.mxu0 %v759
        %771 = vmatpush.msra.mxu0 %v758
        %772 = vmatpush.msra.mxu0 %v757
        %773 = vmatpush.msra.mxu0 %v756
        %774 = vmatpush.msra.mxu0 %v755
        %775 = vmatpush.msra.mxu0 %v754
        %776 = vmatpush.msra.mxu0 %v753
        %777 = vmatpush.msra.mxu0 %v752
        %778 = vmatpush.msra.mxu0 %v751
        %779 = vmatpush.msra.mxu0 %v750
        %780 = vmatpush.msra.mxu0 %v749
        %781 = vmatmul.f32.gmra.mxu0 %v746
        %v782 = vpop.f32.mrf.mxu0
        %v783 = vadd.f32 0.0, %v782
        %784 = vmatmul.f32.gmra.mxu0 %v747
        %v785 = vpop.f32.mrf.mxu0
        %v786 = vadd.f32 0.0, %v785
        %787 = vmatmul.f32.gmra.mxu0 %v748
        %v788 = vpop.f32.mrf.mxu0
        %789 = vdwg.mxu0
        %v790 = vld [vmem:[%s4] sm:$0x1]
        %v792 = vperm.slane %v790, 0
        %v794 = vadd.f32 %v783, %v792
        %v795 = vadd.f32 %v786, %v792
        %v796 = vadd.f32 %v794, %v341
        %v797 = vadd.f32 %v795, %v340
        %v798 = vlaneseq
        %v799 = vand.u32 %v798, 127
        %vm800 = vcmp.lt.s32.totalorder %v799, 8
        %v801 = vsel %vm800, %v796, 0.0
        %v802 = vsel %vm800, %v797, 0.0
        %803 = vadd.xlane.f32.xlu0 %v801
        %v804 = vpop.xlane.xlu0 %803
        %805 = vadd.xlane.f32.xlu0 %v802
        %v806 = vpop.xlane.xlu0 %805
        %v807 = vmul.f32 %v804, 0.125
        %v808 = vmul.f32 %v806, 0.125
        %v809 = vsub.f32 %v796, %v807
        %v810 = vsub.f32 %v797, %v808
        %v811 = vsel %vm800, %v809, 0.0
        %v812 = vsel %vm800, %v810, 0.0
        %v813 = vmul.f32 %v811, %v811
        %v814 = vmul.f32 %v812, %v812
        %815 = vadd.xlane.f32.xlu0 %v813
        %v816 = vpop.xlane.xlu0 %815
        %817 = vadd.xlane.f32.xlu0 %v814
        %v818 = vpop.xlane.xlu0 %817
        %v819 = vmul.f32 %v816, 0.125
        %v820 = vmul.f32 %v818, 0.125
        %v821 = vadd.f32 %v819, 1e-05
        %v822 = vadd.f32 %v820, 1e-05
        %v823 = vrsqrt.pop %v821
        %v824 = vmul.f32 %v823, %v821
        %v825 = vmul.f32 %v824, %v823
        %v826 = vmul.f32 0.5, %v825
        %v827 = vsub.f32 1.5, %v826
        %v828 = vmul.f32 %v823, %v827
        %vm829 = vweird.f32 %v821
        %vm830 = vweird.f32 %v823
        %vm831 = vmor %vm829, %vm830
        %v832 = vsel %vm831, %v823, %v828
        %v833 = vrsqrt.pop %v822
        %v834 = vmul.f32 %v833, %v822
        %v835 = vmul.f32 %v834, %v833
        %v836 = vmul.f32 0.5, %v835
        %v837 = vsub.f32 1.5, %v836
        %v838 = vmul.f32 %v833, %v837
        %vm839 = vweird.f32 %v822
        %vm840 = vweird.f32 %v833
        %vm841 = vmor %vm839, %vm840
        %v842 = vsel %vm841, %v833, %v838
        %v843 = vmul.f32 %v809, %v832
        %v844 = vmul.f32 %v810, %v842
        %v845 = vld [vmem:[%s5] sm:$0x1]
        %v847 = vperm.slane %v845, 0
        %v849 = vmul.f32 %v843, %v847
        %v850 = vmul.f32 %v844, %v847
        %v851 = vld [vmem:[%s6] sm:$0x1]
        %v853 = vperm.slane %v851, 0
        %v855 = vadd.f32 %v849, %v853
        %v856 = vadd.f32 %v850, %v853
        %vm857 = vcmask 64512
        %858 = vst.msk [vmem:[%s288] sm:$0xff] %vm857, %v855
        %859 = vst.msk [vmem:[%s288 + $0x8] sm:$0xff] %vm857, %v856
        %s860 = smul.u32 2, %s25
        %p861 = scmp.lt.s32.totalorder %s24, 1
        %s862 = scalar_select %p861, %s24, 1
        %p863 = scmp.lt.s32.totalorder %s860, 1
        %s864 = scalar_select %p863, %s860, 1
        %s865 = smul.addr %s862, 2
        %s866 = sadd.s32 %s864, %s865
        %s867 = smul.addr %s866, 8
        %s868 = scalar_lea.vmem %s7, %s867
        // Predicated region
        $region57: #{tpu_custom_call.1} parent=43 // pred_check
          %p869 = pneg %p178
        $region58: #{tpu_custom_call.1} parent=43 // pred_check_branch
          %871 = sbr.rel (%p869) target = $region60
        $region59: #{tpu_custom_call.1} parent=43 // pred_region
          %s872 = smul.u32 2, %s25
        $region60: #{tpu_custom_call.1} parent=43 // pred_fallthru
          _
      $region44: #{tpu_custom_call.1} parent=5 // pred_fallthru
        _
      %p873 = scmp.le.s32.totalorder 2, %s15
      // Predicated region
      $region61: #{tpu_custom_call.1} parent=5 // pred_check
        %p874 = pneg %p873
      $region62: #{tpu_custom_call.1} parent=5 // pred_check_branch
        %876 = sbr.rel (%p874) target = $region64
      $region63: #{tpu_custom_call.1} parent=5 // pred_region
        %s877 = ssub.s32 %s15, 2
        // Predicated region
        $region65: #{tpu_custom_call.1} parent=63 // pred_check
          %p878 = pneg %p184
        $region66: #{tpu_custom_call.1} parent=63 // pred_check_branch
          %880 = sbr.rel (%p878) target = $region68
        $region67: #{tpu_custom_call.1} parent=63 // pred_region
          %s881 = smul.u32 2, %s27
          %p882 = scmp.lt.s32.totalorder %s26, 1
          %s883 = scalar_select %p882, %s26, 1
          %p884 = scmp.lt.s32.totalorder %s881, 1
          %s885 = scalar_select %p884, %s881, 1
          %s886 = smul.addr %s883, 2
          %s887 = sadd.s32 %s885, %s886
          %s888 = smul.addr %s887, 8
          %s889 = scalar_lea.vmem %s7, %s888
        $region68: #{tpu_custom_call.1} parent=63 // pred_fallthru
          _
      $region64: #{tpu_custom_call.1} parent=5 // pred_fallthru
        _
    $region6: #{tpu_custom_call.1} parent=1 // loop_footer
      %s19 = sadd.s32 1, %s15
    $region7: #{tpu_custom_call.1} parent=1 // loop_footer_branch
      %14 = sbr.rel target = $region3
    $region8: #{tpu_custom_call.1} parent=1 // loop_exit
      _
    %890 = vsyncpa [#allocation5], 1
    %s891 = scalar_lea.sflag [#allocation5], 1
    %892 = vsyncpa %s891, 1
    %893 = vsyncpa [#allocation7], 1
  %894 = vsyncmov [#allocation3]
  %s895 = vpop.sfrf %894
  %p896 = scmp.eq.s32.totalorder %s895, 0
  %p897 = pneg %p896
  %899 = shalt.err (%p897)

</llo_original>
